<compile_context>
chip_gen: v5e
topology: v5e:2x2
jax: 0.10.0
libtpu: 0.0.40
codegen_flags: <defaults>
</compile_context>

<pallas_src>
import jax
import jax.numpy as jnp
from jax import lax
from jax.experimental import pallas as pl
from jax.experimental.pallas import tpu as pltpu


NF = 64                 # base width of ResCNN
_PAD_TOP = 8            # sublane-aligned zero halo above the activation rows
_PAD_BOT = 8            # zero halo below (needs >= 2 rows for ks=5)
_CMAX = 4 * NF          # widest conv input inside the kernel (block4: 256)


# ----------------------------------------------------------------------------
# Activations (plain jnp -> usable both inside the Pallas kernel and in ref).
# ----------------------------------------------------------------------------
def _act_relu(x):
    return jnp.maximum(x, 0.0)


def _act_leaky_relu(x):            # nn.LeakyReLU(negative_slope=0.2)
    return jnp.where(x > 0, x, 0.2 * x)


def _act_prelu(x):                 # nn.PReLU() at its default init (a = 0.25)
    return jnp.where(x > 0, x, 0.25 * x)


def _act_elu(x):                   # nn.ELU(alpha=0.3)
    return jnp.where(x > 0, x, 0.3 * (jnp.exp(x) - 1.0))


# ----------------------------------------------------------------------------
# Fully fused ResCNN kernel (one grid step = `bt` batch rows through the net)
# ----------------------------------------------------------------------------
def _make_rescnn_kernel(bt, L, cin1):
    """cin1 = 7 * c_in (lane width of the im2col'ed layer-1 input)."""

    def conv_same(xpad_ref, h, w_ref, ks):
        """'same'-padded 1D conv of the (L, C) value `h`.

        The activation is staged through a zero-halo VMEM scratch; each tap is
        a shifted (L, C) x (C, Cout) MXU matmul accumulated in f32.
        """
        c = h.shape[-1]
        pad_l = (ks - 1) // 2
        xpad_ref[_PAD_TOP:_PAD_TOP + L, :c] = h          # halo rows stay zero
        base = _PAD_TOP - pad_l
        acc = jnp.dot(xpad_ref[base:base + L, :c], w_ref[0],
                      preferred_element_type=jnp.float32)
        for k in range(1, ks):                           # static unroll, ks<=5
            acc = acc + jnp.dot(xpad_ref[base + k:base + k + L, :c], w_ref[k],
                                preferred_element_type=jnp.float32)
        return acc

    def kernel(x1_ref, w1_ref, wsc_ref, tsc_ref,
               w12_ref, w13_ref,
               w2_ref, t2_ref, w3_ref, t3_ref, w4_ref, t4_ref,
               o_ref, xpad_ref):
        # Zero the padded scratch once per grid step (tiny); the halo rows are
        # never written afterwards, so they provide the conv zero padding.
        xpad_ref[...] = jnp.zeros_like(xpad_ref)

        for b in range(bt):                              # static unroll over rows
            x1 = x1_ref[b]                               # (L, 7*c_in) im2col input

            # --- block1: conv7 -> conv5 -> conv3, 1x1 shortcut(+BN), add, ReLU
            h = jnp.dot(x1, w1_ref[...], preferred_element_type=jnp.float32)
            sc = jnp.dot(x1, wsc_ref[...],
                         preferred_element_type=jnp.float32) + tsc_ref[...]
            h = conv_same(xpad_ref, h, w12_ref, 5)
            h = conv_same(xpad_ref, h, w13_ref, 3)
            h = _act_relu(h + sc)

            # --- block2 (conv+BN) + LeakyReLU(0.2) ----------------------------
            h = _act_leaky_relu(conv_same(xpad_ref, h, w2_ref, 3) + t2_ref[...])

            # --- block3 (conv+BN) + PReLU(0.25) -------------------------------
            h = _act_prelu(conv_same(xpad_ref, h, w3_ref, 3) + t3_ref[...])

            # --- block4 (conv+BN) + ELU(0.3) + AdaptiveAvgPool1d(1) -----------
            h = _act_elu(conv_same(xpad_ref, h, w4_ref, 3) + t4_ref[...])
            o_ref[b] = jnp.mean(h, axis=0, keepdims=True)     # (1, 128)

    return kernel


# ----------------------------------------------------------------------------
# Wrapper: host-side weight folding + im2col for layer 1, single pallas_call
# ----------------------------------------------------------------------------
def rescnn_forward_pallas(x_bcl, params, *, block_rows=None):
    """ResCNN forward.  x_bcl: (B, C_in, L) in the PyTorch layout -> (B, 128)."""
    B, c_in, L = x_bcl.shape
    nf = NF
    cin1 = 7 * c_in

    # Channels-last so channel dims (64..256) sit on the lane axis.
    x = jnp.transpose(x_bcl, (0, 2, 1)).astype(jnp.float32)      # (B, L, c_in)

    # Layer-1 host-side im2col: Cin is tiny, so build (B, L, 7*c_in) once and
    # turn the first conv into a single K=7*c_in matmul (also provides the
    # ConstantPad1d((3,3)) padding for layer 1).
    xp = jnp.pad(x, ((0, 0), (3, 3), (0, 0)))
    x1 = jnp.concatenate([xp[:, k:k + L, :] for k in range(7)], axis=-1)

    # Fold BN (inference-mode running stats) scale into conv weights.
    def fold(w, bn, eps=1e-5):
        s = bn["gamma"] / jnp.sqrt(bn["var"] + eps)
        t = bn["beta"] - bn["mean"] * s
        return (w * s[None, None, :]).astype(jnp.float32), \
               t.reshape(1, -1).astype(jnp.float32)

    w1 = params["b1_conv1"].reshape(cin1, nf).astype(jnp.float32)
    # 1x1 shortcut conv (+ folded BN scale) expressed in the im2col domain:
    # the unshifted tap (k=3) occupies columns [3*c_in, 4*c_in).
    wsc_f, tsc = fold(params["b1_sc_conv"], params["b1_sc_bn"])
    wsc = jnp.zeros((cin1, nf), jnp.float32).at[3 * c_in:4 * c_in, :].set(wsc_f[0])
    w12 = params["b1_conv2"].astype(jnp.float32)                 # (5, 64, 64)
    w13 = params["b1_conv3"].astype(jnp.float32)                 # (3, 64, 64)
    w2f, t2 = fold(params["b2_conv"], params["b2_bn"])           # (3, 64, 128)
    w3f, t3 = fold(params["b3_conv"], params["b3_bn"])           # (3, 128, 256)
    w4f, t4 = fold(params["b4_conv"], params["b4_bn"])           # (3, 256, 128)

    # Rows per grid step: amortise per-step overhead while keeping >= 2 grid
    # steps so dimension_semantics=("parallel",) can feed both v7x TCs.
    if block_rows is None:
        bt = 1 if B <= 2 else min(8, B)
        while bt > 1 and pl.cdiv(B, bt) < 2:
            bt //= 2
    else:
        bt = int(block_rows)
    n_steps = pl.cdiv(B, bt)
    Bp = n_steps * bt
    if Bp != B:
        x1 = jnp.pad(x1, ((0, Bp - B), (0, 0), (0, 0)))

    in_specs = [
        pl.BlockSpec((bt, L, cin1), lambda b: (b, 0, 0)),        # im2col input
        pl.BlockSpec((cin1, nf), lambda b: (0, 0)),              # conv1 (im2col)
        pl.BlockSpec((cin1, nf), lambda b: (0, 0)),              # shortcut (im2col)
        pl.BlockSpec((1, nf), lambda b: (0, 0)),                 # shortcut BN shift
        pl.BlockSpec((5, nf, nf), lambda b: (0, 0, 0)),          # block1 conv2
        pl.BlockSpec((3, nf, nf), lambda b: (0, 0, 0)),          # block1 conv3
        pl.BlockSpec((3, nf, 2 * nf), lambda b: (0, 0, 0)),      # block2 conv (BN folded)
        pl.BlockSpec((1, 2 * nf), lambda b: (0, 0)),             # block2 BN shift
        pl.BlockSpec((3, 2 * nf, 4 * nf), lambda b: (0, 0, 0)),  # block3 conv
        pl.BlockSpec((1, 4 * nf), lambda b: (0, 0)),             # block3 BN shift
        pl.BlockSpec((3, 4 * nf, 2 * nf), lambda b: (0, 0, 0)),  # block4 conv
        pl.BlockSpec((1, 2 * nf), lambda b: (0, 0)),             # block4 BN shift
    ]
    inputs = [x1, w1, wsc, tsc, w12, w13, w2f, t2, w3f, t3, w4f, t4]

    out_shape = jax.ShapeDtypeStruct((Bp, 1, 2 * nf), jnp.float32)
    out_spec = pl.BlockSpec((bt, 1, 2 * nf), lambda b: (b, 0, 0))

    conv_flops_per_pos = (7 * c_in * nf + c_in * nf + 5 * nf * nf + 3 * nf * nf
                          + 3 * nf * 2 * nf + 3 * 2 * nf * 4 * nf
                          + 3 * 4 * nf * 2 * nf)
    weight_elems = (w1.size + wsc.size + w12.size + w13.size
                    + w2f.size + w3f.size + w4f.size
                    + tsc.size + t2.size + t3.size + t4.size)
    cost = pl.CostEstimate(
        flops=2 * Bp * L * conv_flops_per_pos,
        transcendentals=Bp * L * 2 * nf,                         # ELU exp
        bytes_accessed=4 * (x1.size + weight_elems + Bp * 2 * nf))

    out = pl.pallas_call(
        _make_rescnn_kernel(bt, L, cin1),
        out_shape=out_shape,
        grid=(n_steps,),
        in_specs=in_specs,
        out_specs=out_spec,
        scratch_shapes=[pltpu.VMEM((_PAD_TOP + L + _PAD_BOT, _CMAX), jnp.float32)],
        compiler_params=pltpu.CompilerParams(
            dimension_semantics=("parallel",)),     # batch rows are independent
        cost_estimate=cost,
    )(*inputs)

    # Squeeze(dim=-1): dropping the size-1 pooled axis is a free metadata
    # reshape; GAP itself was fused into the kernel.
    return out.reshape(Bp, 2 * nf)[:B]


# ----------------------------------------------------------------------------
# Deterministic parameter construction
# ----------------------------------------------------------------------------
def make_params(key, c_in):
    nf = NF

    def conv_w(k, ks, cin, cout):
        # (K, Cin, Cout) layout; He-like scale keeps activations O(1).
        return jax.random.normal(k, (ks, cin, cout), jnp.float32) * (
            1.0 / jnp.sqrt(float(cin * ks)))

    def bn(k, c):
        k1, k2, k3, k4 = jax.random.split(k, 4)
        return dict(
            gamma=1.0 + 0.1 * jax.random.normal(k1, (c,), jnp.float32),
            beta=0.1 * jax.random.normal(k2, (c,), jnp.float32),
            mean=0.1 * jax.random.normal(k3, (c,), jnp.float32),
            var=jnp.abs(1.0 + 0.1 * jax.random.normal(k4, (c,), jnp.float32)),
        )

    ks = jax.random.split(key, 11)
    return dict(
        b1_conv1=conv_w(ks[0], 7, c_in, nf),
        b1_conv2=conv_w(ks[1], 5, nf, nf),
        b1_conv3=conv_w(ks[2], 3, nf, nf),
        b1_sc_conv=conv_w(ks[3], 1, c_in, nf),
        b1_sc_bn=bn(ks[4], nf),
        b2_conv=conv_w(ks[5], 3, nf, nf * 2),
        b2_bn=bn(ks[6], nf * 2),
        b3_conv=conv_w(ks[7], 3, nf * 2, nf * 4),
        b3_bn=bn(ks[8], nf * 4),
        b4_conv=conv_w(ks[9], 3, nf * 4, nf * 2),
        b4_bn=bn(ks[10], nf * 2),
    )


# ----------------------------------------------------------------------------
# Pure-JAX reference (independent code path: lax.conv_general_dilated)
# ----------------------------------------------------------------------------
def _ref_conv1d_same(x, w, ks):
    pad_l, pad_r = (ks - 1) // 2, ks // 2
    return lax.conv_general_dilated(
        x, w, window_strides=(1,), padding=[(pad_l, pad_r)],
        dimension_numbers=("NWC", "WIO", "NWC"),
        precision=lax.Precision.HIGHEST)


def _ref_bn(x, p, eps=1e-5):
    return (x - p["mean"]) / jnp.sqrt(p["var"] + eps) * p["gamma"] + p["beta"]


def rescnn_forward_ref(x_bcl, params):
    x = jnp.transpose(x_bcl, (0, 2, 1)).astype(jnp.float32)     # (B, L, C_in)

    h = _ref_conv1d_same(x, params["b1_conv1"], 7)
    h = _ref_conv1d_same(h, params["b1_conv2"], 5)
    h = _ref_conv1d_same(h, params["b1_conv3"], 3)
    sc = _ref_bn(_ref_conv1d_same(x, params["b1_sc_conv"], 1), params["b1_sc_bn"])
    h = jnp.maximum(h + sc, 0.0)

    h = _act_leaky_relu(_ref_bn(_ref_conv1d_same(h, params["b2_conv"], 3),
                                params["b2_bn"]))
    h = _act_prelu(_ref_bn(_ref_conv1d_same(h, params["b3_conv"], 3),
                           params["b3_bn"]))
    h = _act_elu(_ref_bn(_ref_conv1d_same(h, params["b4_conv"], 3),
                         params["b4_bn"]))
    return jnp.mean(h, axis=1)          # AdaptiveAvgPool1d(1) + Squeeze(-1)


# ----------------------------------------------------------------------------
if __name__ == "__main__":
    key = jax.random.PRNGKey(0)
    k_x, k_p = jax.random.split(key)

    B, C_IN, L = 2, 4, 16                       # small demo shapes
    x = jax.random.normal(k_x, (B, C_IN, L), dtype=jnp.float32)
    params = make_params(k_p, C_IN)

    out = jax.jit(rescnn_forward_pallas)(x, params)
    out = jax.block_until_ready(out)

    ref = rescnn_forward_ref(x, params)
    assert out.shape == ref.shape == (B, 128), out.shape
    assert out.dtype == jnp.float32
    # Tolerance covers the default (bf16-pass) MXU precision of the in-kernel
    # f32 matmuls vs. the HIGHEST-precision XLA reference convolutions.
    assert jnp.allclose(out, ref, rtol=2e-2, atol=2e-2), (
        float(jnp.max(jnp.abs(out - ref))))

    print("KERNEL_OK")
</pallas_src>

<mosaic_0001>
module attributes {stable_mosaic.version = 11 : i64} {
  func.func @kernel(%arg0: i32, %arg1: memref<1x16x28xf32, #tpu.memory_space<vmem>>, %arg2: memref<28x64xf32, #tpu.memory_space<vmem>>, %arg3: memref<28x64xf32, #tpu.memory_space<vmem>>, %arg4: memref<1x64xf32, #tpu.memory_space<vmem>>, %arg5: memref<5x64x64xf32, #tpu.memory_space<vmem>>, %arg6: memref<3x64x64xf32, #tpu.memory_space<vmem>>, %arg7: memref<3x64x128xf32, #tpu.memory_space<vmem>>, %arg8: memref<1x128xf32, #tpu.memory_space<vmem>>, %arg9: memref<3x128x256xf32, #tpu.memory_space<vmem>>, %arg10: memref<1x256xf32, #tpu.memory_space<vmem>>, %arg11: memref<3x256x128xf32, #tpu.memory_space<vmem>>, %arg12: memref<1x128xf32, #tpu.memory_space<vmem>>, %arg13: memref<1x1x128xf32, #tpu.memory_space<vmem>>, %arg14: memref<32x256xf32, #tpu.memory_space<vmem>>) attributes {dimension_semantics = [#tpu.dimension_semantics<parallel>], iteration_bounds = array<i64: 2>, scalar_prefetch = 0 : i64, scratch_operands = 1 : i64, tpu.core_type = #tpu.core_type<tc>, window_params = [{transform_indices = @transform_0, window_bounds = array<i64: 1, 16, 28>}, {pipeline_mode = #tpu.pipeline_mode<synchronous>, transform_indices = @transform_1, window_bounds = array<i64: 28, 64>}, {pipeline_mode = #tpu.pipeline_mode<synchronous>, transform_indices = @transform_2, window_bounds = array<i64: 28, 64>}, {pipeline_mode = #tpu.pipeline_mode<synchronous>, transform_indices = @transform_3, window_bounds = array<i64: 1, 64>}, {pipeline_mode = #tpu.pipeline_mode<synchronous>, transform_indices = @transform_4, window_bounds = array<i64: 5, 64, 64>}, {pipeline_mode = #tpu.pipeline_mode<synchronous>, transform_indices = @transform_5, window_bounds = array<i64: 3, 64, 64>}, {pipeline_mode = #tpu.pipeline_mode<synchronous>, transform_indices = @transform_6, window_bounds = array<i64: 3, 64, 128>}, {pipeline_mode = #tpu.pipeline_mode<synchronous>, transform_indices = @transform_7, window_bounds = array<i64: 1, 128>}, {pipeline_mode = #tpu.pipeline_mode<synchronous>, transform_indices = @transform_8, window_bounds = array<i64: 3, 128, 256>}, {pipeline_mode = #tpu.pipeline_mode<synchronous>, transform_indices = @transform_9, window_bounds = array<i64: 1, 256>}, {pipeline_mode = #tpu.pipeline_mode<synchronous>, transform_indices = @transform_10, window_bounds = array<i64: 3, 256, 128>}, {pipeline_mode = #tpu.pipeline_mode<synchronous>, transform_indices = @transform_11, window_bounds = array<i64: 1, 128>}, {transform_indices = @transform_12, window_bounds = array<i64: 1, 1, 128>}]} {
    %cst = arith.constant 0.000000e+00 : f32
    %0 = vector.broadcast %cst : f32 to vector<32x256xf32>
    %c0 = arith.constant 0 : index
    %c0_0 = arith.constant 0 : index
    %1 = vector.load %arg14[%c0, %c0_0] : memref<32x256xf32, #tpu.memory_space<vmem>>, vector<32x256xf32>
    tpu.vector_store %arg14[%c0, %c0_0], %0 {strides = array<i32>} : memref<32x256xf32, #tpu.memory_space<vmem>>, vector<32x256xf32>,
    %c0_1 = arith.constant 0 : index
    %c0_2 = arith.constant 0 : index
    %c0_3 = arith.constant 0 : index
    %2 = vector.load %arg1[%c0_1, %c0_2, %c0_3] : memref<1x16x28xf32, #tpu.memory_space<vmem>>, vector<1x16x28xf32>
    %3 = vector.shape_cast %2 : vector<1x16x28xf32> to vector<16x28xf32>
    %c0_4 = arith.constant 0 : index
    %c0_5 = arith.constant 0 : index
    %4 = vector.load %arg2[%c0_4, %c0_5] : memref<28x64xf32, #tpu.memory_space<vmem>>, vector<28x64xf32>
    %cst_6 = arith.constant dense<0.000000e+00> : vector<16x64xf32>
    %5 = tpu.matmul %3, %4, %cst_6 {dimension_numbers = #tpu.dot_dimension_numbers<[1], [0], [0], [1], [0, 0, 1, 1], [], []>} : vector<16x28xf32>, vector<28x64xf32>, vector<16x64xf32> -> vector<16x64xf32>
    %c0_7 = arith.constant 0 : index
    %c0_8 = arith.constant 0 : index
    %6 = vector.load %arg3[%c0_7, %c0_8] : memref<28x64xf32, #tpu.memory_space<vmem>>, vector<28x64xf32>
    %cst_9 = arith.constant dense<0.000000e+00> : vector<16x64xf32>
    %7 = tpu.matmul %3, %6, %cst_9 {dimension_numbers = #tpu.dot_dimension_numbers<[1], [0], [0], [1], [0, 0, 1, 1], [], []>} : vector<16x28xf32>, vector<28x64xf32>, vector<16x64xf32> -> vector<16x64xf32>
    %c0_10 = arith.constant 0 : index
    %c0_11 = arith.constant 0 : index
    %8 = vector.load %arg4[%c0_10, %c0_11] : memref<1x64xf32, #tpu.memory_space<vmem>>, vector<1x64xf32>
    %9 = vector.broadcast %8 : vector<1x64xf32> to vector<16x64xf32>
    %10 = arith.addf %7, %9 : vector<16x64xf32>
    %c8 = arith.constant 8 : index
    %c0_12 = arith.constant 0 : index
    %11 = vector.load %arg14[%c8, %c0_12] : memref<32x256xf32, #tpu.memory_space<vmem>>, vector<16x64xf32>
    tpu.vector_store %arg14[%c8, %c0_12], %5 {strides = array<i32>} : memref<32x256xf32, #tpu.memory_space<vmem>>, vector<16x64xf32>,
    %c6 = arith.constant 6 : index
    %c0_13 = arith.constant 0 : index
    %12 = vector.load %arg14[%c6, %c0_13] : memref<32x256xf32, #tpu.memory_space<vmem>>, vector<16x64xf32>
    %c0_14 = arith.constant 0 : index
    %c0_15 = arith.constant 0 : index
    %c0_16 = arith.constant 0 : index
    %13 = vector.load %arg5[%c0_14, %c0_15, %c0_16] : memref<5x64x64xf32, #tpu.memory_space<vmem>>, vector<1x64x64xf32>
    %14 = vector.shape_cast %13 : vector<1x64x64xf32> to vector<64x64xf32>
    %cst_17 = arith.constant dense<0.000000e+00> : vector<16x64xf32>
    %15 = tpu.matmul %12, %14, %cst_17 {dimension_numbers = #tpu.dot_dimension_numbers<[1], [0], [0], [1], [0, 0, 1, 1], [], []>} : vector<16x64xf32>, vector<64x64xf32>, vector<16x64xf32> -> vector<16x64xf32>
    %c7 = arith.constant 7 : index
    %c0_18 = arith.constant 0 : index
    %16 = vector.load %arg14[%c7, %c0_18] : memref<32x256xf32, #tpu.memory_space<vmem>>, vector<16x64xf32>
    %c1 = arith.constant 1 : index
    %c0_19 = arith.constant 0 : index
    %c0_20 = arith.constant 0 : index
    %17 = vector.load %arg5[%c1, %c0_19, %c0_20] : memref<5x64x64xf32, #tpu.memory_space<vmem>>, vector<1x64x64xf32>
    %18 = vector.shape_cast %17 : vector<1x64x64xf32> to vector<64x64xf32>
    %cst_21 = arith.constant dense<0.000000e+00> : vector<16x64xf32>
    %19 = tpu.matmul %16, %18, %cst_21 {dimension_numbers = #tpu.dot_dimension_numbers<[1], [0], [0], [1], [0, 0, 1, 1], [], []>} : vector<16x64xf32>, vector<64x64xf32>, vector<16x64xf32> -> vector<16x64xf32>
    %20 = arith.addf %15, %19 : vector<16x64xf32>
    %c8_22 = arith.constant 8 : index
    %c0_23 = arith.constant 0 : index
    %21 = vector.load %arg14[%c8_22, %c0_23] : memref<32x256xf32, #tpu.memory_space<vmem>>, vector<16x64xf32>
    %c2 = arith.constant 2 : index
    %c0_24 = arith.constant 0 : index
    %c0_25 = arith.constant 0 : index
    %22 = vector.load %arg5[%c2, %c0_24, %c0_25] : memref<5x64x64xf32, #tpu.memory_space<vmem>>, vector<1x64x64xf32>
    %23 = vector.shape_cast %22 : vector<1x64x64xf32> to vector<64x64xf32>
    %cst_26 = arith.constant dense<0.000000e+00> : vector<16x64xf32>
    %24 = tpu.matmul %21, %23, %cst_26 {dimension_numbers = #tpu.dot_dimension_numbers<[1], [0], [0], [1], [0, 0, 1, 1], [], []>} : vector<16x64xf32>, vector<64x64xf32>, vector<16x64xf32> -> vector<16x64xf32>
    %25 = arith.addf %20, %24 : vector<16x64xf32>
    %c9 = arith.constant 9 : index
    %c0_27 = arith.constant 0 : index
    %26 = vector.load %arg14[%c9, %c0_27] : memref<32x256xf32, #tpu.memory_space<vmem>>, vector<16x64xf32>
    %c3 = arith.constant 3 : index
    %c0_28 = arith.constant 0 : index
    %c0_29 = arith.constant 0 : index
    %27 = vector.load %arg5[%c3, %c0_28, %c0_29] : memref<5x64x64xf32, #tpu.memory_space<vmem>>, vector<1x64x64xf32>
    %28 = vector.shape_cast %27 : vector<1x64x64xf32> to vector<64x64xf32>
    %cst_30 = arith.constant dense<0.000000e+00> : vector<16x64xf32>
    %29 = tpu.matmul %26, %28, %cst_30 {dimension_numbers = #tpu.dot_dimension_numbers<[1], [0], [0], [1], [0, 0, 1, 1], [], []>} : vector<16x64xf32>, vector<64x64xf32>, vector<16x64xf32> -> vector<16x64xf32>
    %30 = arith.addf %25, %29 : vector<16x64xf32>
    %c10 = arith.constant 10 : index
    %c0_31 = arith.constant 0 : index
    %31 = vector.load %arg14[%c10, %c0_31] : memref<32x256xf32, #tpu.memory_space<vmem>>, vector<16x64xf32>
    %c4 = arith.constant 4 : index
    %c0_32 = arith.constant 0 : index
    %c0_33 = arith.constant 0 : index
    %32 = vector.load %arg5[%c4, %c0_32, %c0_33] : memref<5x64x64xf32, #tpu.memory_space<vmem>>, vector<1x64x64xf32>
    %33 = vector.shape_cast %32 : vector<1x64x64xf32> to vector<64x64xf32>
    %cst_34 = arith.constant dense<0.000000e+00> : vector<16x64xf32>
    %34 = tpu.matmul %31, %33, %cst_34 {dimension_numbers = #tpu.dot_dimension_numbers<[1], [0], [0], [1], [0, 0, 1, 1], [], []>} : vector<16x64xf32>, vector<64x64xf32>, vector<16x64xf32> -> vector<16x64xf32>
    %35 = arith.addf %30, %34 : vector<16x64xf32>
    %c8_35 = arith.constant 8 : index
    %c0_36 = arith.constant 0 : index
    %36 = vector.load %arg14[%c8_35, %c0_36] : memref<32x256xf32, #tpu.memory_space<vmem>>, vector<16x64xf32>
    tpu.vector_store %arg14[%c8_35, %c0_36], %35 {strides = array<i32>} : memref<32x256xf32, #tpu.memory_space<vmem>>, vector<16x64xf32>,
    %c7_37 = arith.constant 7 : index
    %c0_38 = arith.constant 0 : index
    %37 = vector.load %arg14[%c7_37, %c0_38] : memref<32x256xf32, #tpu.memory_space<vmem>>, vector<16x64xf32>
    %c0_39 = arith.constant 0 : index
    %c0_40 = arith.constant 0 : index
    %c0_41 = arith.constant 0 : index
    %38 = vector.load %arg6[%c0_39, %c0_40, %c0_41] : memref<3x64x64xf32, #tpu.memory_space<vmem>>, vector<1x64x64xf32>
    %39 = vector.shape_cast %38 : vector<1x64x64xf32> to vector<64x64xf32>
    %cst_42 = arith.constant dense<0.000000e+00> : vector<16x64xf32>
    %40 = tpu.matmul %37, %39, %cst_42 {dimension_numbers = #tpu.dot_dimension_numbers<[1], [0], [0], [1], [0, 0, 1, 1], [], []>} : vector<16x64xf32>, vector<64x64xf32>, vector<16x64xf32> -> vector<16x64xf32>
    %c8_43 = arith.constant 8 : index
    %c0_44 = arith.constant 0 : index
    %41 = vector.load %arg14[%c8_43, %c0_44] : memref<32x256xf32, #tpu.memory_space<vmem>>, vector<16x64xf32>
    %c1_45 = arith.constant 1 : index
    %c0_46 = arith.constant 0 : index
    %c0_47 = arith.constant 0 : index
    %42 = vector.load %arg6[%c1_45, %c0_46, %c0_47] : memref<3x64x64xf32, #tpu.memory_space<vmem>>, vector<1x64x64xf32>
    %43 = vector.shape_cast %42 : vector<1x64x64xf32> to vector<64x64xf32>
    %cst_48 = arith.constant dense<0.000000e+00> : vector<16x64xf32>
    %44 = tpu.matmul %41, %43, %cst_48 {dimension_numbers = #tpu.dot_dimension_numbers<[1], [0], [0], [1], [0, 0, 1, 1], [], []>} : vector<16x64xf32>, vector<64x64xf32>, vector<16x64xf32> -> vector<16x64xf32>
    %45 = arith.addf %40, %44 : vector<16x64xf32>
    %c9_49 = arith.constant 9 : index
    %c0_50 = arith.constant 0 : index
    %46 = vector.load %arg14[%c9_49, %c0_50] : memref<32x256xf32, #tpu.memory_space<vmem>>, vector<16x64xf32>
    %c2_51 = arith.constant 2 : index
    %c0_52 = arith.constant 0 : index
    %c0_53 = arith.constant 0 : index
    %47 = vector.load %arg6[%c2_51, %c0_52, %c0_53] : memref<3x64x64xf32, #tpu.memory_space<vmem>>, vector<1x64x64xf32>
    %48 = vector.shape_cast %47 : vector<1x64x64xf32> to vector<64x64xf32>
    %cst_54 = arith.constant dense<0.000000e+00> : vector<16x64xf32>
    %49 = tpu.matmul %46, %48, %cst_54 {dimension_numbers = #tpu.dot_dimension_numbers<[1], [0], [0], [1], [0, 0, 1, 1], [], []>} : vector<16x64xf32>, vector<64x64xf32>, vector<16x64xf32> -> vector<16x64xf32>
    %50 = arith.addf %45, %49 : vector<16x64xf32>
    %51 = arith.addf %50, %10 : vector<16x64xf32>
    %cst_55 = arith.constant 0.000000e+00 : f32
    %52 = vector.broadcast %cst_55 : f32 to vector<16x64xf32>
    %53 = arith.maximumf %51, %52 : vector<16x64xf32>
    %c8_56 = arith.constant 8 : index
    %c0_57 = arith.constant 0 : index
    %54 = vector.load %arg14[%c8_56, %c0_57] : memref<32x256xf32, #tpu.memory_space<vmem>>, vector<16x64xf32>
    tpu.vector_store %arg14[%c8_56, %c0_57], %53 {strides = array<i32>} : memref<32x256xf32, #tpu.memory_space<vmem>>, vector<16x64xf32>,
    %c7_58 = arith.constant 7 : index
    %c0_59 = arith.constant 0 : index
    %55 = vector.load %arg14[%c7_58, %c0_59] : memref<32x256xf32, #tpu.memory_space<vmem>>, vector<16x64xf32>
    %c0_60 = arith.constant 0 : index
    %c0_61 = arith.constant 0 : index
    %c0_62 = arith.constant 0 : index
    %56 = vector.load %arg7[%c0_60, %c0_61, %c0_62] : memref<3x64x128xf32, #tpu.memory_space<vmem>>, vector<1x64x128xf32>
    %57 = vector.shape_cast %56 : vector<1x64x128xf32> to vector<64x128xf32>
    %cst_63 = arith.constant dense<0.000000e+00> : vector<16x128xf32>
    %58 = tpu.matmul %55, %57, %cst_63 {dimension_numbers = #tpu.dot_dimension_numbers<[1], [0], [0], [1], [0, 0, 1, 1], [], []>} : vector<16x64xf32>, vector<64x128xf32>, vector<16x128xf32> -> vector<16x128xf32>
    %c8_64 = arith.constant 8 : index
    %c0_65 = arith.constant 0 : index
    %59 = vector.load %arg14[%c8_64, %c0_65] : memref<32x256xf32, #tpu.memory_space<vmem>>, vector<16x64xf32>
    %c1_66 = arith.constant 1 : index
    %c0_67 = arith.constant 0 : index
    %c0_68 = arith.constant 0 : index
    %60 = vector.load %arg7[%c1_66, %c0_67, %c0_68] : memref<3x64x128xf32, #tpu.memory_space<vmem>>, vector<1x64x128xf32>
    %61 = vector.shape_cast %60 : vector<1x64x128xf32> to vector<64x128xf32>
    %cst_69 = arith.constant dense<0.000000e+00> : vector<16x128xf32>
    %62 = tpu.matmul %59, %61, %cst_69 {dimension_numbers = #tpu.dot_dimension_numbers<[1], [0], [0], [1], [0, 0, 1, 1], [], []>} : vector<16x64xf32>, vector<64x128xf32>, vector<16x128xf32> -> vector<16x128xf32>
    %63 = arith.addf %58, %62 : vector<16x128xf32>
    %c9_70 = arith.constant 9 : index
    %c0_71 = arith.constant 0 : index
    %64 = vector.load %arg14[%c9_70, %c0_71] : memref<32x256xf32, #tpu.memory_space<vmem>>, vector<16x64xf32>
    %c2_72 = arith.constant 2 : index
    %c0_73 = arith.constant 0 : index
    %c0_74 = arith.constant 0 : index
    %65 = vector.load %arg7[%c2_72, %c0_73, %c0_74] : memref<3x64x128xf32, #tpu.memory_space<vmem>>, vector<1x64x128xf32>
    %66 = vector.shape_cast %65 : vector<1x64x128xf32> to vector<64x128xf32>
    %cst_75 = arith.constant dense<0.000000e+00> : vector<16x128xf32>
    %67 = tpu.matmul %64, %66, %cst_75 {dimension_numbers = #tpu.dot_dimension_numbers<[1], [0], [0], [1], [0, 0, 1, 1], [], []>} : vector<16x64xf32>, vector<64x128xf32>, vector<16x128xf32> -> vector<16x128xf32>
    %68 = arith.addf %63, %67 : vector<16x128xf32>
    %c0_76 = arith.constant 0 : index
    %c0_77 = arith.constant 0 : index
    %69 = vector.load %arg8[%c0_76, %c0_77] : memref<1x128xf32, #tpu.memory_space<vmem>>, vector<1x128xf32>
    %70 = vector.broadcast %69 : vector<1x128xf32> to vector<16x128xf32>
    %71 = arith.addf %68, %70 : vector<16x128xf32>
    %cst_78 = arith.constant 0.000000e+00 : f32
    %72 = vector.broadcast %cst_78 : f32 to vector<16x128xf32>
    %73 = arith.cmpf ogt, %71, %72 : vector<16x128xf32>
    %cst_79 = arith.constant 2.000000e-01 : f32
    %74 = vector.broadcast %cst_79 : f32 to vector<16x128xf32>
    %75 = arith.mulf %74, %71 : vector<16x128xf32>
    %76 = arith.select %73, %71, %75 : vector<16x128xi1>, vector<16x128xf32>
    %c8_80 = arith.constant 8 : index
    %c0_81 = arith.constant 0 : index
    %77 = vector.load %arg14[%c8_80, %c0_81] : memref<32x256xf32, #tpu.memory_space<vmem>>, vector<16x128xf32>
    tpu.vector_store %arg14[%c8_80, %c0_81], %76 {strides = array<i32>} : memref<32x256xf32, #tpu.memory_space<vmem>>, vector<16x128xf32>,
    %c7_82 = arith.constant 7 : index
    %c0_83 = arith.constant 0 : index
    %78 = vector.load %arg14[%c7_82, %c0_83] : memref<32x256xf32, #tpu.memory_space<vmem>>, vector<16x128xf32>
    %c0_84 = arith.constant 0 : index
    %c0_85 = arith.constant 0 : index
    %c0_86 = arith.constant 0 : index
    %79 = vector.load %arg9[%c0_84, %c0_85, %c0_86] : memref<3x128x256xf32, #tpu.memory_space<vmem>>, vector<1x128x256xf32>
    %80 = vector.shape_cast %79 : vector<1x128x256xf32> to vector<128x256xf32>
    %cst_87 = arith.constant dense<0.000000e+00> : vector<16x256xf32>
    %81 = tpu.matmul %78, %80, %cst_87 {dimension_numbers = #tpu.dot_dimension_numbers<[1], [0], [0], [1], [0, 0, 1, 1], [], []>} : vector<16x128xf32>, vector<128x256xf32>, vector<16x256xf32> -> vector<16x256xf32>
    %c8_88 = arith.constant 8 : index
    %c0_89 = arith.constant 0 : index
    %82 = vector.load %arg14[%c8_88, %c0_89] : memref<32x256xf32, #tpu.memory_space<vmem>>, vector<16x128xf32>
    %c1_90 = arith.constant 1 : index
    %c0_91 = arith.constant 0 : index
    %c0_92 = arith.constant 0 : index
    %83 = vector.load %arg9[%c1_90, %c0_91, %c0_92] : memref<3x128x256xf32, #tpu.memory_space<vmem>>, vector<1x128x256xf32>
    %84 = vector.shape_cast %83 : vector<1x128x256xf32> to vector<128x256xf32>
    %cst_93 = arith.constant dense<0.000000e+00> : vector<16x256xf32>
    %85 = tpu.matmul %82, %84, %cst_93 {dimension_numbers = #tpu.dot_dimension_numbers<[1], [0], [0], [1], [0, 0, 1, 1], [], []>} : vector<16x128xf32>, vector<128x256xf32>, vector<16x256xf32> -> vector<16x256xf32>
    %86 = arith.addf %81, %85 : vector<16x256xf32>
    %c9_94 = arith.constant 9 : index
    %c0_95 = arith.constant 0 : index
    %87 = vector.load %arg14[%c9_94, %c0_95] : memref<32x256xf32, #tpu.memory_space<vmem>>, vector<16x128xf32>
    %c2_96 = arith.constant 2 : index
    %c0_97 = arith.constant 0 : index
    %c0_98 = arith.constant 0 : index
    %88 = vector.load %arg9[%c2_96, %c0_97, %c0_98] : memref<3x128x256xf32, #tpu.memory_space<vmem>>, vector<1x128x256xf32>
    %89 = vector.shape_cast %88 : vector<1x128x256xf32> to vector<128x256xf32>
    %cst_99 = arith.constant dense<0.000000e+00> : vector<16x256xf32>
    %90 = tpu.matmul %87, %89, %cst_99 {dimension_numbers = #tpu.dot_dimension_numbers<[1], [0], [0], [1], [0, 0, 1, 1], [], []>} : vector<16x128xf32>, vector<128x256xf32>, vector<16x256xf32> -> vector<16x256xf32>
    %91 = arith.addf %86, %90 : vector<16x256xf32>
    %c0_100 = arith.constant 0 : index
    %c0_101 = arith.constant 0 : index
    %92 = vector.load %arg10[%c0_100, %c0_101] : memref<1x256xf32, #tpu.memory_space<vmem>>, vector<1x256xf32>
    %93 = vector.broadcast %92 : vector<1x256xf32> to vector<16x256xf32>
    %94 = arith.addf %91, %93 : vector<16x256xf32>
    %cst_102 = arith.constant 0.000000e+00 : f32
    %95 = vector.broadcast %cst_102 : f32 to vector<16x256xf32>
    %96 = arith.cmpf ogt, %94, %95 : vector<16x256xf32>
    %cst_103 = arith.constant 2.500000e-01 : f32
    %97 = vector.broadcast %cst_103 : f32 to vector<16x256xf32>
    %98 = arith.mulf %97, %94 : vector<16x256xf32>
    %99 = arith.select %96, %94, %98 : vector<16x256xi1>, vector<16x256xf32>
    %c8_104 = arith.constant 8 : index
    %c0_105 = arith.constant 0 : index
    %100 = vector.load %arg14[%c8_104, %c0_105] : memref<32x256xf32, #tpu.memory_space<vmem>>, vector<16x256xf32>
    tpu.vector_store %arg14[%c8_104, %c0_105], %99 {strides = array<i32>} : memref<32x256xf32, #tpu.memory_space<vmem>>, vector<16x256xf32>,
    %c7_106 = arith.constant 7 : index
    %c0_107 = arith.constant 0 : index
    %101 = vector.load %arg14[%c7_106, %c0_107] : memref<32x256xf32, #tpu.memory_space<vmem>>, vector<16x256xf32>
    %c0_108 = arith.constant 0 : index
    %c0_109 = arith.constant 0 : index
    %c0_110 = arith.constant 0 : index
    %102 = vector.load %arg11[%c0_108, %c0_109, %c0_110] : memref<3x256x128xf32, #tpu.memory_space<vmem>>, vector<1x256x128xf32>
    %103 = vector.shape_cast %102 : vector<1x256x128xf32> to vector<256x128xf32>
    %cst_111 = arith.constant dense<0.000000e+00> : vector<16x128xf32>
    %104 = tpu.matmul %101, %103, %cst_111 {dimension_numbers = #tpu.dot_dimension_numbers<[1], [0], [0], [1], [0, 0, 1, 1], [], []>} : vector<16x256xf32>, vector<256x128xf32>, vector<16x128xf32> -> vector<16x128xf32>
    %c8_112 = arith.constant 8 : index
    %c0_113 = arith.constant 0 : index
    %105 = vector.load %arg14[%c8_112, %c0_113] : memref<32x256xf32, #tpu.memory_space<vmem>>, vector<16x256xf32>
    %c1_114 = arith.constant 1 : index
    %c0_115 = arith.constant 0 : index
    %c0_116 = arith.constant 0 : index
    %106 = vector.load %arg11[%c1_114, %c0_115, %c0_116] : memref<3x256x128xf32, #tpu.memory_space<vmem>>, vector<1x256x128xf32>
    %107 = vector.shape_cast %106 : vector<1x256x128xf32> to vector<256x128xf32>
    %cst_117 = arith.constant dense<0.000000e+00> : vector<16x128xf32>
    %108 = tpu.matmul %105, %107, %cst_117 {dimension_numbers = #tpu.dot_dimension_numbers<[1], [0], [0], [1], [0, 0, 1, 1], [], []>} : vector<16x256xf32>, vector<256x128xf32>, vector<16x128xf32> -> vector<16x128xf32>
    %109 = arith.addf %104, %108 : vector<16x128xf32>
    %c9_118 = arith.constant 9 : index
    %c0_119 = arith.constant 0 : index
    %110 = vector.load %arg14[%c9_118, %c0_119] : memref<32x256xf32, #tpu.memory_space<vmem>>, vector<16x256xf32>
    %c2_120 = arith.constant 2 : index
    %c0_121 = arith.constant 0 : index
    %c0_122 = arith.constant 0 : index
    %111 = vector.load %arg11[%c2_120, %c0_121, %c0_122] : memref<3x256x128xf32, #tpu.memory_space<vmem>>, vector<1x256x128xf32>
    %112 = vector.shape_cast %111 : vector<1x256x128xf32> to vector<256x128xf32>
    %cst_123 = arith.constant dense<0.000000e+00> : vector<16x128xf32>
    %113 = tpu.matmul %110, %112, %cst_123 {dimension_numbers = #tpu.dot_dimension_numbers<[1], [0], [0], [1], [0, 0, 1, 1], [], []>} : vector<16x256xf32>, vector<256x128xf32>, vector<16x128xf32> -> vector<16x128xf32>
    %114 = arith.addf %109, %113 : vector<16x128xf32>
    %c0_124 = arith.constant 0 : index
    %c0_125 = arith.constant 0 : index
    %115 = vector.load %arg12[%c0_124, %c0_125] : memref<1x128xf32, #tpu.memory_space<vmem>>, vector<1x128xf32>
    %116 = vector.broadcast %115 : vector<1x128xf32> to vector<16x128xf32>
    %117 = arith.addf %114, %116 : vector<16x128xf32>
    %cst_126 = arith.constant 0.000000e+00 : f32
    %118 = vector.broadcast %cst_126 : f32 to vector<16x128xf32>
    %119 = arith.cmpf ogt, %117, %118 : vector<16x128xf32>
    %120 = math.exp %117 : vector<16x128xf32>
    %cst_127 = arith.constant 1.000000e+00 : f32
    %121 = vector.broadcast %cst_127 : f32 to vector<16x128xf32>
    %122 = arith.subf %120, %121 : vector<16x128xf32>
    %cst_128 = arith.constant 3.000000e-01 : f32
    %123 = vector.broadcast %cst_128 : f32 to vector<16x128xf32>
    %124 = arith.mulf %123, %122 : vector<16x128xf32>
    %125 = arith.select %119, %117, %124 : vector<16x128xi1>, vector<16x128xf32>
    %cst_129 = arith.constant dense<0.000000e+00> : vector<128xf32>
    %126 = vector.multi_reduction <add>, %125, %cst_129 [0] : vector<16x128xf32> to vector<128xf32>
    %127 = vector.shape_cast %126 : vector<128xf32> to vector<1x128xf32>
    %cst_130 = arith.constant 1.600000e+01 : f32
    %128 = vector.broadcast %cst_130 : f32 to vector<1x128xf32>
    %129 = arith.divf %127, %128 : vector<1x128xf32>
    %c0_131 = arith.constant 0 : index
    %c0_132 = arith.constant 0 : index
    %c0_133 = arith.constant 0 : index
    %130 = vector.load %arg13[%c0_131, %c0_132, %c0_133] : memref<1x1x128xf32, #tpu.memory_space<vmem>>, vector<1x1x128xf32>
    %131 = vector.shape_cast %130 : vector<1x1x128xf32> to vector<1x128xf32>
    %132 = vector.shape_cast %129 : vector<1x128xf32> to vector<1x1x128xf32>
    tpu.vector_store %arg13[%c0_131, %c0_132, %c0_133], %132 {strides = array<i32>} : memref<1x1x128xf32, #tpu.memory_space<vmem>>, vector<1x1x128xf32>,
    return
  }
  func.func @transform_0(%arg0: i32) -> (i32, i32, i32) {
    %c0_i32 = arith.constant 0 : i32
    %c0_i32_0 = arith.constant 0 : i32
    %c0_i32_1 = arith.constant 0 : i32
    return %arg0, %c0_i32, %c0_i32_0 : i32, i32, i32
  }
  func.func @transform_1(%arg0: i32) -> (i32, i32) {
    %c0_i32 = arith.constant 0 : i32
    %c0_i32_0 = arith.constant 0 : i32
    %c0_i32_1 = arith.constant 0 : i32
    return %c0_i32, %c0_i32_0 : i32, i32
  }
  func.func @transform_2(%arg0: i32) -> (i32, i32) {
    %c0_i32 = arith.constant 0 : i32
    %c0_i32_0 = arith.constant 0 : i32
    %c0_i32_1 = arith.constant 0 : i32
    return %c0_i32, %c0_i32_0 : i32, i32
  }
  func.func @transform_3(%arg0: i32) -> (i32, i32) {
    %c0_i32 = arith.constant 0 : i32
    %c0_i32_0 = arith.constant 0 : i32
    %c0_i32_1 = arith.constant 0 : i32
    return %c0_i32, %c0_i32_0 : i32, i32
  }
  func.func @transform_4(%arg0: i32) -> (i32, i32, i32) {
    %c0_i32 = arith.constant 0 : i32
    %c0_i32_0 = arith.constant 0 : i32
    %c0_i32_1 = arith.constant 0 : i32
    %c0_i32_2 = arith.constant 0 : i32
    return %c0_i32, %c0_i32_0, %c0_i32_1 : i32, i32, i32
  }
  func.func @transform_5(%arg0: i32) -> (i32, i32, i32) {
    %c0_i32 = arith.constant 0 : i32
    %c0_i32_0 = arith.constant 0 : i32
    %c0_i32_1 = arith.constant 0 : i32
    %c0_i32_2 = arith.constant 0 : i32
    return %c0_i32, %c0_i32_0, %c0_i32_1 : i32, i32, i32
  }
  func.func @transform_6(%arg0: i32) -> (i32, i32, i32) {
    %c0_i32 = arith.constant 0 : i32
    %c0_i32_0 = arith.constant 0 : i32
    %c0_i32_1 = arith.constant 0 : i32
    %c0_i32_2 = arith.constant 0 : i32
    return %c0_i32, %c0_i32_0, %c0_i32_1 : i32, i32, i32
  }
  func.func @transform_7(%arg0: i32) -> (i32, i32) {
    %c0_i32 = arith.constant 0 : i32
    %c0_i32_0 = arith.constant 0 : i32
    %c0_i32_1 = arith.constant 0 : i32
    return %c0_i32, %c0_i32_0 : i32, i32
  }
  func.func @transform_8(%arg0: i32) -> (i32, i32, i32) {
    %c0_i32 = arith.constant 0 : i32
    %c0_i32_0 = arith.constant 0 : i32
    %c0_i32_1 = arith.constant 0 : i32
    %c0_i32_2 = arith.constant 0 : i32
    return %c0_i32, %c0_i32_0, %c0_i32_1 : i32, i32, i32
  }
  func.func @transform_9(%arg0: i32) -> (i32, i32) {
    %c0_i32 = arith.constant 0 : i32
    %c0_i32_0 = arith.constant 0 : i32
    %c0_i32_1 = arith.constant 0 : i32
    return %c0_i32, %c0_i32_0 : i32, i32
  }
  func.func @transform_10(%arg0: i32) -> (i32, i32, i32) {
    %c0_i32 = arith.constant 0 : i32
    %c0_i32_0 = arith.constant 0 : i32
    %c0_i32_1 = arith.constant 0 : i32
    %c0_i32_2 = arith.constant 0 : i32
    return %c0_i32, %c0_i32_0, %c0_i32_1 : i32, i32, i32
  }
  func.func @transform_11(%arg0: i32) -> (i32, i32) {
    %c0_i32 = arith.constant 0 : i32
    %c0_i32_0 = arith.constant 0 : i32
    %c0_i32_1 = arith.constant 0 : i32
    return %c0_i32, %c0_i32_0 : i32, i32
  }
  func.func @transform_12(%arg0: i32) -> (i32, i32, i32) {
    %c0_i32 = arith.constant 0 : i32
    %c0_i32_0 = arith.constant 0 : i32
    %c0_i32_1 = arith.constant 0 : i32
    return %arg0, %c0_i32, %c0_i32_0 : i32, i32, i32
  }
}

</mosaic_0001>

<llo_original>
// kernel: rescnn_forward_pallas.1
$region0: #{rescnn_forward_pallas.1}
  #allocation0 [shape = 'u32[]', space=smem, size = 0x4, offset = 0x4, fixed_abs, tag = 'smem constant byte address 0x4 - core index']
  #allocation1 [shape = 'u32[72,128]{1,0:T(1,128)}', space=vmem, size = 0x9000, scoped, tag = 'internal scratch']
  #allocation2 [shape = 'f32[32,256]{1,0:T(8,128)}', space=vmem, size = 0x8000, scoped, tag = 'scratch operand']
  %s0 = inlined_call_operand.vmem [shape: f32[2,16,28], index: 0, kind: input, shape index: {}]
  %s1 = inlined_call_operand.vmem [shape: f32[28,64], index: 1, kind: input, shape index: {}]
  %s2 = inlined_call_operand.vmem [shape: f32[28,64], index: 2, kind: input, shape index: {}]
  %s3 = inlined_call_operand.vmem [shape: f32[1,64], index: 3, kind: input, shape index: {}]
  %s4 = inlined_call_operand.vmem [shape: f32[5,64,64], index: 4, kind: input, shape index: {}]
  %s5 = inlined_call_operand.vmem [shape: f32[3,64,64], index: 5, kind: input, shape index: {}]
  %s6 = inlined_call_operand.vmem [shape: f32[3,64,128], index: 6, kind: input, shape index: {}]
  %s7 = inlined_call_operand.vmem [shape: f32[1,128], index: 7, kind: input, shape index: {}]
  %s8 = inlined_call_operand.vmem [shape: f32[3,128,256], index: 8, kind: input, shape index: {}]
  %s9 = inlined_call_operand.vmem [shape: f32[1,256], index: 9, kind: input, shape index: {}]
  %s10 = inlined_call_operand.vmem [shape: f32[3,256,128], index: 10, kind: input, shape index: {}]
  %s11 = inlined_call_operand.vmem [shape: f32[1,128], index: 11, kind: input, shape index: {}]
  %s12 = inlined_call_operand.hbm [shape: f32[2,1,128], index: 12, kind: output, shape index: {}]
  %s13 = sld [smem:[#allocation0]]
  $region81: #{rescnn_forward_pallas.1} parent=0
    _
  %s15 = ssub.s32 1, %s13
  %s16 = scalar_select 0, %s15, %s13
  $region1: #{rescnn_forward_pallas.1} parent=0
    #allocation3 [shape = 'u8[1024]{0}', space=vmem, size = 0x400, scoped, tag = 'output window, operand 0']
    #allocation4 [shape = 's32[2]{0}', space=sflag, size = 0x8, scoped, tag = 'scoped memory for rescnn_forward_pallas.1']
    %17 = vsyncpa [#allocation4], 0
    %s18 = scalar_lea.sflag [#allocation4], 1
    %19 = vsyncpa %s18, 0
    loop: start=0, step=1, limit=4
    $region2: #{rescnn_forward_pallas.1} parent=1 // loop_pre_header
      _
    $region3: #{rescnn_forward_pallas.1} parent=1 // loop_header
      %s21 = sphi 0, %s25
      %p22 = scmp.ge.s32.totalorder %s21, 4
      %s31 = sphi 0, %s33
      %s34 = sphi 0, %s31
      %s35 = sphi 0, %s34
      %s51 = sphi 0, %s35
      %s55 = sphi 0, %s55
      %s57 = sphi 0, %s55
      %s58 = sphi 0, %s57
      %s72 = sphi 0, %s58
      %s76 = sphi 0, %s76
      %s78 = sphi 0, %s76
      %s79 = sphi 0, %s78
      %s93 = sphi 0, %s79
      %s97 = sphi 0, %s97
      %s99 = sphi 0, %s97
      %s100 = sphi 0, %s99
      %s114 = sphi 0, %s100
      %s118 = sphi 0, %s118
      %s120 = sphi 0, %s118
      %s121 = sphi 0, %s120
      %s135 = sphi 0, %s121
      %s139 = sphi 0, %s139
      %s141 = sphi 0, %s139
      %s142 = sphi 0, %s141
      %s156 = sphi 0, %s142
      %s160 = sphi 0, %s160
      %s162 = sphi 0, %s160
      %s163 = sphi 0, %s162
      %s177 = sphi 0, %s163
      %s181 = sphi 0, %s181
      %s183 = sphi 0, %s181
      %s184 = sphi 0, %s183
      %s198 = sphi 0, %s184
      %s202 = sphi 0, %s202
      %s204 = sphi 0, %s202
      %s205 = sphi 0, %s204
      %s219 = sphi 0, %s205
      %s223 = sphi 0, %s223
      %s225 = sphi 0, %s223
      %s226 = sphi 0, %s225
      %s240 = sphi 0, %s226
      %s244 = sphi 0, %s244
      %s246 = sphi 0, %s244
      %s247 = sphi 0, %s246
      %s261 = sphi 0, %s247
      %s265 = sphi 0, %s265
      %s267 = sphi 0, %s265
      %s268 = sphi 0, %s267
      %s282 = sphi 0, %s268
      %s288 = sphi 0, %s290
      %s291 = sphi 0, %s288
      %s292 = sphi 0, %s291
      %s308 = sphi 0, %s292
    $region4: #{rescnn_forward_pallas.1} parent=1 // loop_header_branch
      %24 = sbr.rel (%p22) target = $region8
    $region5: #{rescnn_forward_pallas.1} parent=1 // loop_body
      %s26 = ssub.s32 %s21, 1
      %s27 = ssub.s32 %s21, 2
      %s28 = sadd.s32 %s21, 1
      %s29 = ssub.s32 %s21, %s28
      %p30 = scmp.eq.s32.totalorder %s29, 0
      %s32 = sadd.s32 %s31, 1
      %s33 = scalar_select %p30, %s31, %s32
      %p36 = pneg %p30
      %p37 = scmp.eq.s32.totalorder %s21, 1
      %p38 = por %p36, %p37
      %p39 = scmp.ne.s32.totalorder %s31, %s34
      %p40 = scmp.eq.s32.totalorder %s21, 0
      %p41 = por %p39, %p40
      %p42 = scmp.ne.s32.totalorder %s31, %s34
      %p43 = scmp.eq.s32.totalorder %s26, 1
      %p44 = por %p42, %p43
      %p45 = scmp.ne.s32.totalorder %s34, %s35
      %p46 = scmp.eq.s32.totalorder %s26, 0
      %p47 = por %p45, %p46
      %p48 = scmp.ne.s32.totalorder %s34, %s35
      %p49 = scmp.eq.s32.totalorder %s27, 1
      %p50 = por %p48, %p49
      %p52 = scmp.ne.s32.totalorder %s35, %s51
      %p53 = scmp.eq.s32.totalorder %s27, 0
      %p54 = por %p52, %p53
      %s56 = sadd.s32 %s55, 1
      %p59 = scmp.eq.s32.totalorder %s21, 1
      %p60 = scmp.ne.s32.totalorder %s55, %s57
      %p61 = scmp.eq.s32.totalorder %s21, 0
      %p62 = por %p60, %p61
      %p63 = scmp.ne.s32.totalorder %s55, %s57
      %p64 = scmp.eq.s32.totalorder %s26, 1
      %p65 = por %p63, %p64
      %p66 = scmp.ne.s32.totalorder %s57, %s58
      %p67 = scmp.eq.s32.totalorder %s26, 0
      %p68 = por %p66, %p67
      %p69 = scmp.ne.s32.totalorder %s57, %s58
      %p70 = scmp.eq.s32.totalorder %s27, 1
      %p71 = por %p69, %p70
      %p73 = scmp.ne.s32.totalorder %s58, %s72
      %p74 = scmp.eq.s32.totalorder %s27, 0
      %p75 = por %p73, %p74
      %s77 = sadd.s32 %s76, 1
      %p80 = scmp.eq.s32.totalorder %s21, 1
      %p81 = scmp.ne.s32.totalorder %s76, %s78
      %p82 = scmp.eq.s32.totalorder %s21, 0
      %p83 = por %p81, %p82
      %p84 = scmp.ne.s32.totalorder %s76, %s78
      %p85 = scmp.eq.s32.totalorder %s26, 1
      %p86 = por %p84, %p85
      %p87 = scmp.ne.s32.totalorder %s78, %s79
      %p88 = scmp.eq.s32.totalorder %s26, 0
      %p89 = por %p87, %p88
      %p90 = scmp.ne.s32.totalorder %s78, %s79
      %p91 = scmp.eq.s32.totalorder %s27, 1
      %p92 = por %p90, %p91
      %p94 = scmp.ne.s32.totalorder %s79, %s93
      %p95 = scmp.eq.s32.totalorder %s27, 0
      %p96 = por %p94, %p95
      %s98 = sadd.s32 %s97, 1
      %p101 = scmp.eq.s32.totalorder %s21, 1
      %p102 = scmp.ne.s32.totalorder %s97, %s99
      %p103 = scmp.eq.s32.totalorder %s21, 0
      %p104 = por %p102, %p103
      %p105 = scmp.ne.s32.totalorder %s97, %s99
      %p106 = scmp.eq.s32.totalorder %s26, 1
      %p107 = por %p105, %p106
      %p108 = scmp.ne.s32.totalorder %s99, %s100
      %p109 = scmp.eq.s32.totalorder %s26, 0
      %p110 = por %p108, %p109
      %p111 = scmp.ne.s32.totalorder %s99, %s100
      %p112 = scmp.eq.s32.totalorder %s27, 1
      %p113 = por %p111, %p112
      %p115 = scmp.ne.s32.totalorder %s100, %s114
      %p116 = scmp.eq.s32.totalorder %s27, 0
      %p117 = por %p115, %p116
      %s119 = sadd.s32 %s118, 1
      %p122 = scmp.eq.s32.totalorder %s21, 1
      %p123 = scmp.ne.s32.totalorder %s118, %s120
      %p124 = scmp.eq.s32.totalorder %s21, 0
      %p125 = por %p123, %p124
      %p126 = scmp.ne.s32.totalorder %s118, %s120
      %p127 = scmp.eq.s32.totalorder %s26, 1
      %p128 = por %p126, %p127
      %p129 = scmp.ne.s32.totalorder %s120, %s121
      %p130 = scmp.eq.s32.totalorder %s26, 0
      %p131 = por %p129, %p130
      %p132 = scmp.ne.s32.totalorder %s120, %s121
      %p133 = scmp.eq.s32.totalorder %s27, 1
      %p134 = por %p132, %p133
      %p136 = scmp.ne.s32.totalorder %s121, %s135
      %p137 = scmp.eq.s32.totalorder %s27, 0
      %p138 = por %p136, %p137
      %s140 = sadd.s32 %s139, 1
      %p143 = scmp.eq.s32.totalorder %s21, 1
      %p144 = scmp.ne.s32.totalorder %s139, %s141
      %p145 = scmp.eq.s32.totalorder %s21, 0
      %p146 = por %p144, %p145
      %p147 = scmp.ne.s32.totalorder %s139, %s141
      %p148 = scmp.eq.s32.totalorder %s26, 1
      %p149 = por %p147, %p148
      %p150 = scmp.ne.s32.totalorder %s141, %s142
      %p151 = scmp.eq.s32.totalorder %s26, 0
      %p152 = por %p150, %p151
      %p153 = scmp.ne.s32.totalorder %s141, %s142
      %p154 = scmp.eq.s32.totalorder %s27, 1
      %p155 = por %p153, %p154
      %p157 = scmp.ne.s32.totalorder %s142, %s156
      %p158 = scmp.eq.s32.totalorder %s27, 0
      %p159 = por %p157, %p158
      %s161 = sadd.s32 %s160, 1
      %p164 = scmp.eq.s32.totalorder %s21, 1
      %p165 = scmp.ne.s32.totalorder %s160, %s162
      %p166 = scmp.eq.s32.totalorder %s21, 0
      %p167 = por %p165, %p166
      %p168 = scmp.ne.s32.totalorder %s160, %s162
      %p169 = scmp.eq.s32.totalorder %s26, 1
      %p170 = por %p168, %p169
      %p171 = scmp.ne.s32.totalorder %s162, %s163
      %p172 = scmp.eq.s32.totalorder %s26, 0
      %p173 = por %p171, %p172
      %p174 = scmp.ne.s32.totalorder %s162, %s163
      %p175 = scmp.eq.s32.totalorder %s27, 1
      %p176 = por %p174, %p175
      %p178 = scmp.ne.s32.totalorder %s163, %s177
      %p179 = scmp.eq.s32.totalorder %s27, 0
      %p180 = por %p178, %p179
      %s182 = sadd.s32 %s181, 1
      %p185 = scmp.eq.s32.totalorder %s21, 1
      %p186 = scmp.ne.s32.totalorder %s181, %s183
      %p187 = scmp.eq.s32.totalorder %s21, 0
      %p188 = por %p186, %p187
      %p189 = scmp.ne.s32.totalorder %s181, %s183
      %p190 = scmp.eq.s32.totalorder %s26, 1
      %p191 = por %p189, %p190
      %p192 = scmp.ne.s32.totalorder %s183, %s184
      %p193 = scmp.eq.s32.totalorder %s26, 0
      %p194 = por %p192, %p193
      %p195 = scmp.ne.s32.totalorder %s183, %s184
      %p196 = scmp.eq.s32.totalorder %s27, 1
      %p197 = por %p195, %p196
      %p199 = scmp.ne.s32.totalorder %s184, %s198
      %p200 = scmp.eq.s32.totalorder %s27, 0
      %p201 = por %p199, %p200
      %s203 = sadd.s32 %s202, 1
      %p206 = scmp.eq.s32.totalorder %s21, 1
      %p207 = scmp.ne.s32.totalorder %s202, %s204
      %p208 = scmp.eq.s32.totalorder %s21, 0
      %p209 = por %p207, %p208
      %p210 = scmp.ne.s32.totalorder %s202, %s204
      %p211 = scmp.eq.s32.totalorder %s26, 1
      %p212 = por %p210, %p211
      %p213 = scmp.ne.s32.totalorder %s204, %s205
      %p214 = scmp.eq.s32.totalorder %s26, 0
      %p215 = por %p213, %p214
      %p216 = scmp.ne.s32.totalorder %s204, %s205
      %p217 = scmp.eq.s32.totalorder %s27, 1
      %p218 = por %p216, %p217
      %p220 = scmp.ne.s32.totalorder %s205, %s219
      %p221 = scmp.eq.s32.totalorder %s27, 0
      %p222 = por %p220, %p221
      %s224 = sadd.s32 %s223, 1
      %p227 = scmp.eq.s32.totalorder %s21, 1
      %p228 = scmp.ne.s32.totalorder %s223, %s225
      %p229 = scmp.eq.s32.totalorder %s21, 0
      %p230 = por %p228, %p229
      %p231 = scmp.ne.s32.totalorder %s223, %s225
      %p232 = scmp.eq.s32.totalorder %s26, 1
      %p233 = por %p231, %p232
      %p234 = scmp.ne.s32.totalorder %s225, %s226
      %p235 = scmp.eq.s32.totalorder %s26, 0
      %p236 = por %p234, %p235
      %p237 = scmp.ne.s32.totalorder %s225, %s226
      %p238 = scmp.eq.s32.totalorder %s27, 1
      %p239 = por %p237, %p238
      %p241 = scmp.ne.s32.totalorder %s226, %s240
      %p242 = scmp.eq.s32.totalorder %s27, 0
      %p243 = por %p241, %p242
      %s245 = sadd.s32 %s244, 1
      %p248 = scmp.eq.s32.totalorder %s21, 1
      %p249 = scmp.ne.s32.totalorder %s244, %s246
      %p250 = scmp.eq.s32.totalorder %s21, 0
      %p251 = por %p249, %p250
      %p252 = scmp.ne.s32.totalorder %s244, %s246
      %p253 = scmp.eq.s32.totalorder %s26, 1
      %p254 = por %p252, %p253
      %p255 = scmp.ne.s32.totalorder %s246, %s247
      %p256 = scmp.eq.s32.totalorder %s26, 0
      %p257 = por %p255, %p256
      %p258 = scmp.ne.s32.totalorder %s246, %s247
      %p259 = scmp.eq.s32.totalorder %s27, 1
      %p260 = por %p258, %p259
      %p262 = scmp.ne.s32.totalorder %s247, %s261
      %p263 = scmp.eq.s32.totalorder %s27, 0
      %p264 = por %p262, %p263
      %s266 = sadd.s32 %s265, 1
      %p269 = scmp.eq.s32.totalorder %s21, 1
      %p270 = scmp.ne.s32.totalorder %s265, %s267
      %p271 = scmp.eq.s32.totalorder %s21, 0
      %p272 = por %p270, %p271
      %p273 = scmp.ne.s32.totalorder %s265, %s267
      %p274 = scmp.eq.s32.totalorder %s26, 1
      %p275 = por %p273, %p274
      %p276 = scmp.ne.s32.totalorder %s267, %s268
      %p277 = scmp.eq.s32.totalorder %s26, 0
      %p278 = por %p276, %p277
      %p279 = scmp.ne.s32.totalorder %s267, %s268
      %p280 = scmp.eq.s32.totalorder %s27, 1
      %p281 = por %p279, %p280
      %p283 = scmp.ne.s32.totalorder %s268, %s282
      %p284 = scmp.eq.s32.totalorder %s27, 0
      %p285 = por %p283, %p284
      %s286 = ssub.s32 %s21, %s28
      %p287 = scmp.eq.s32.totalorder %s286, 0
      %s289 = sadd.s32 %s288, 1
      %s290 = scalar_select %p287, %s288, %s289
      %p293 = pneg %p287
      %p294 = scmp.eq.s32.totalorder %s21, 1
      %p295 = por %p293, %p294
      %p296 = scmp.ne.s32.totalorder %s288, %s291
      %p297 = scmp.eq.s32.totalorder %s21, 0
      %p298 = por %p296, %p297
      %p299 = scmp.ne.s32.totalorder %s288, %s291
      %p300 = scmp.eq.s32.totalorder %s26, 1
      %p301 = por %p299, %p300
      %p302 = scmp.ne.s32.totalorder %s291, %s292
      %p303 = scmp.eq.s32.totalorder %s26, 0
      %p304 = por %p302, %p303
      %p305 = scmp.ne.s32.totalorder %s291, %s292
      %p306 = scmp.eq.s32.totalorder %s27, 1
      %p307 = por %p305, %p306
      %p309 = scmp.ne.s32.totalorder %s292, %s308
      %p310 = scmp.eq.s32.totalorder %s27, 0
      %p311 = por %p309, %p310
      %p312 = scmp.le.s32.totalorder 1, %s21
      %p313 = scmp.lt.s32.totalorder %s21, 3
      %p314 = pnand %p312, %p313
      %p315 = pneg %p314
      // Predicated region
      $region9: #{rescnn_forward_pallas.1} parent=5 // pred_check
        _
      $region10: #{rescnn_forward_pallas.1} parent=5 // pred_check_branch
        %317 = sbr.rel (%p314) target = $region12
      $region11: #{rescnn_forward_pallas.1} parent=5 // pred_region
        %s318 = ssub.s32 %s21, 1
        // Predicated region
        $region13: #{rescnn_forward_pallas.1} parent=11 // pred_check
          %p319 = pneg %p68
        $region14: #{rescnn_forward_pallas.1} parent=11 // pred_check_branch
          %321 = sbr.rel (%p319) target = $region16
        $region15: #{rescnn_forward_pallas.1} parent=11 // pred_region
          _
        $region16: #{rescnn_forward_pallas.1} parent=11 // pred_fallthru
          _
        // Predicated region
        $region17: #{rescnn_forward_pallas.1} parent=11 // pred_check
          %p322 = pneg %p89
        $region18: #{rescnn_forward_pallas.1} parent=11 // pred_check_branch
          %324 = sbr.rel (%p322) target = $region20
        $region19: #{rescnn_forward_pallas.1} parent=11 // pred_region
          _
        $region20: #{rescnn_forward_pallas.1} parent=11 // pred_fallthru
          _
        // Predicated region
        $region21: #{rescnn_forward_pallas.1} parent=11 // pred_check
          %p325 = pneg %p110
        $region22: #{rescnn_forward_pallas.1} parent=11 // pred_check_branch
          %327 = sbr.rel (%p325) target = $region24
        $region23: #{rescnn_forward_pallas.1} parent=11 // pred_region
          _
        $region24: #{rescnn_forward_pallas.1} parent=11 // pred_fallthru
          _
        // Predicated region
        $region25: #{rescnn_forward_pallas.1} parent=11 // pred_check
          %p328 = pneg %p131
        $region26: #{rescnn_forward_pallas.1} parent=11 // pred_check_branch
          %330 = sbr.rel (%p328) target = $region28
        $region27: #{rescnn_forward_pallas.1} parent=11 // pred_region
          _
        $region28: #{rescnn_forward_pallas.1} parent=11 // pred_fallthru
          _
        // Predicated region
        $region29: #{rescnn_forward_pallas.1} parent=11 // pred_check
          %p331 = pneg %p152
        $region30: #{rescnn_forward_pallas.1} parent=11 // pred_check_branch
          %333 = sbr.rel (%p331) target = $region32
        $region31: #{rescnn_forward_pallas.1} parent=11 // pred_region
          _
        $region32: #{rescnn_forward_pallas.1} parent=11 // pred_fallthru
          _
        // Predicated region
        $region33: #{rescnn_forward_pallas.1} parent=11 // pred_check
          %p334 = pneg %p173
        $region34: #{rescnn_forward_pallas.1} parent=11 // pred_check_branch
          %336 = sbr.rel (%p334) target = $region36
        $region35: #{rescnn_forward_pallas.1} parent=11 // pred_region
          _
        $region36: #{rescnn_forward_pallas.1} parent=11 // pred_fallthru
          _
        // Predicated region
        $region37: #{rescnn_forward_pallas.1} parent=11 // pred_check
          %p337 = pneg %p194
        $region38: #{rescnn_forward_pallas.1} parent=11 // pred_check_branch
          %339 = sbr.rel (%p337) target = $region40
        $region39: #{rescnn_forward_pallas.1} parent=11 // pred_region
          _
        $region40: #{rescnn_forward_pallas.1} parent=11 // pred_fallthru
          _
        // Predicated region
        $region41: #{rescnn_forward_pallas.1} parent=11 // pred_check
          %p340 = pneg %p215
        $region42: #{rescnn_forward_pallas.1} parent=11 // pred_check_branch
          %342 = sbr.rel (%p340) target = $region44
        $region43: #{rescnn_forward_pallas.1} parent=11 // pred_region
          _
        $region44: #{rescnn_forward_pallas.1} parent=11 // pred_fallthru
          _
        // Predicated region
        $region45: #{rescnn_forward_pallas.1} parent=11 // pred_check
          %p343 = pneg %p236
        $region46: #{rescnn_forward_pallas.1} parent=11 // pred_check_branch
          %345 = sbr.rel (%p343) target = $region48
        $region47: #{rescnn_forward_pallas.1} parent=11 // pred_region
          _
        $region48: #{rescnn_forward_pallas.1} parent=11 // pred_fallthru
          _
        // Predicated region
        $region49: #{rescnn_forward_pallas.1} parent=11 // pred_check
          %p346 = pneg %p257
        $region50: #{rescnn_forward_pallas.1} parent=11 // pred_check_branch
          %348 = sbr.rel (%p346) target = $region52
        $region51: #{rescnn_forward_pallas.1} parent=11 // pred_region
          _
        $region52: #{rescnn_forward_pallas.1} parent=11 // pred_fallthru
          _
        // Predicated region
        $region53: #{rescnn_forward_pallas.1} parent=11 // pred_check
          %p349 = pneg %p278
        $region54: #{rescnn_forward_pallas.1} parent=11 // pred_check_branch
          %351 = sbr.rel (%p349) target = $region56
        $region55: #{rescnn_forward_pallas.1} parent=11 // pred_region
          _
        $region56: #{rescnn_forward_pallas.1} parent=11 // pred_fallthru
          _
      $region12: #{rescnn_forward_pallas.1} parent=5 // pred_fallthru
        _
      %p352 = scmp.lt.s32.totalorder %s21, 2
      // Predicated region
      $region57: #{rescnn_forward_pallas.1} parent=5 // pred_check
        %p353 = pneg %p352
      $region58: #{rescnn_forward_pallas.1} parent=5 // pred_check_branch
        %355 = sbr.rel (%p353) target = $region60
      $region59: #{rescnn_forward_pallas.1} parent=5 // pred_region
        // Predicated region
        $region61: #{rescnn_forward_pallas.1} parent=59 // pred_check
          %p356 = pneg %p41
        $region62: #{rescnn_forward_pallas.1} parent=59 // pred_check_branch
          %358 = sbr.rel (%p356) target = $region64
        $region63: #{rescnn_forward_pallas.1} parent=59 // pred_region
          %p359 = scmp.lt.s32.totalorder %s21, 1
          %s360 = scalar_select %p359, %s21, 1
          %s361 = smul.addr %s360, 2
          %s362 = smul.addr %s361, 8
          %s363 = scalar_lea.vmem %s0, %s362
        $region64: #{rescnn_forward_pallas.1} parent=59 // pred_fallthru
          _
      $region60: #{rescnn_forward_pallas.1} parent=5 // pred_fallthru
        _
      %p364 = scmp.le.s32.totalorder 1, %s21
      %p365 = scmp.lt.s32.totalorder %s21, 3
      %p366 = pnand %p364, %p365
      %p367 = pneg %p366
      // Predicated region
      $region65: #{rescnn_forward_pallas.1} parent=5 // pred_check
        _
      $region66: #{rescnn_forward_pallas.1} parent=5 // pred_check_branch
        %369 = sbr.rel (%p366) target = $region68
      $region67: #{rescnn_forward_pallas.1} parent=5 // pred_region
        %s370 = ssub.s32 %s21, 1
        %p371 = scmp.lt.s32.totalorder %s26, 1
        %s372 = scalar_select %p371, %s26, 1
        %s373 = smul.addr %s372, 2
        %s374 = smul.addr %s373, 8
        %s375 = scalar_lea.vmem %s0, %s374
        %p376 = pneg %p47
        %p377 = pneg %p44
        %p378 = pneg %p68
        %p379 = pneg %p65
        %p380 = pneg %p89
        %p381 = pneg %p86
        %p382 = pneg %p110
        %p383 = pneg %p107
        %p384 = pneg %p131
        %p385 = pneg %p128
        %p386 = pneg %p152
        %p387 = pneg %p149
        %p388 = pneg %p173
        %p389 = pneg %p170
        %p390 = pneg %p194
        %p391 = pneg %p191
        %p392 = pneg %p215
        %p393 = pneg %p212
        %p394 = pneg %p236
        %p395 = pneg %p233
        %p396 = pneg %p257
        %p397 = pneg %p254
        %p398 = pneg %p278
        %p399 = pneg %p275
        %p400 = pneg %p304
        %p401 = pneg %p301
        %s402 = sand.u32 %s291, 1
        %s403 = scalar_lea.sflag [#allocation4], %s402
        %s404 = sand.u32 %s291, 1
        %s405 = scalar_lea.vmem [#allocation3], %s404
        %p406 = scmp.lt.s32.totalorder %s26, 1
        %s407 = scalar_select %p406, %s26, 1
        %s408 = smul.addr %s407, 2
        %s409 = smul.addr %s408, 8
        %s410 = scalar_lea.vmem %s0, %s409
        %411 = vst [vmem:[#allocation2] sm:$0xff] 0.0
        %412 = vst [vmem:[#allocation2 + $0x8] sm:$0xff] 0.0
        %413 = vst [vmem:[#allocation2 + $0x10] sm:$0xff] 0.0
        %414 = vst [vmem:[#allocation2 + $0x18] sm:$0xff] 0.0
        %415 = vst [vmem:[#allocation2 + $0x20] sm:$0xff] 0.0
        %416 = vst [vmem:[#allocation2 + $0x28] sm:$0xff] 0.0
        %417 = vst [vmem:[#allocation2 + $0x30] sm:$0xff] 0.0
        %418 = vst [vmem:[#allocation2 + $0x38] sm:$0xff] 0.0
        %v419 = vld [vmem:[%s410] sm:$0xff]
        %v420 = vld [vmem:[%s410 + $0x8] sm:$0xff]
        %v421 = vld [vmem:[%s1] sm:$0xff]
        %v422 = vld [vmem:[%s1 + $0x8] sm:$0xff]
        %v423 = vld [vmem:[%s1 + $0x10] sm:$0xff]
        %v424 = vld [vmem:[%s1 + $0x18] sm:$0xf]
        %vm425 = vcmask 228352
        %v427 = vsel %vm425, %v419, 0
        %v430 = vsel %vm425, %v420, 0
        %vm432 = vcmask 1043456
        %v434 = vsel %vm432, %v424, 0
        %436 = vmatpush.msra.mxu0 0.0
        %437 = vmatpush.msra.mxu0 0.0
        %438 = vmatpush.msra.mxu0 0.0
        %439 = vmatpush.msra.mxu0 0.0
        %440 = vmatpush.msra.mxu0 0.0
        %441 = vmatpush.msra.mxu0 0.0
        %442 = vmatpush.msra.mxu0 0.0
        %443 = vmatpush.msra.mxu0 0.0
        %444 = vmatpush.msra.mxu0 0.0
        %445 = vmatpush.msra.mxu0 0.0
        %446 = vmatpush.msra.mxu0 0.0
        %447 = vmatpush.msra.mxu0 0.0
        %448 = vmatpush.msra.mxu0 %v434
        %449 = vmatpush.msra.mxu0 %v423
        %450 = vmatpush.msra.mxu0 %v422
        %451 = vmatpush.msra.mxu0 %v421
        %452 = vmatmul.f32.gmra.mxu0 %v427
        %v453 = vpop.f32.mrf.mxu0
        %v454 = vadd.f32 0.0, %v453
        %455 = vmatmul.f32.gmra.mxu0 %v430
        %v456 = vpop.f32.mrf.mxu0
        %v457 = vadd.f32 0.0, %v456
        %458 = vdwg.mxu0
        %v459 = vld [vmem:[%s2] sm:$0xff]
        %v460 = vld [vmem:[%s2 + $0x8] sm:$0xff]
        %v461 = vld [vmem:[%s2 + $0x10] sm:$0xff]
        %v462 = vld [vmem:[%s2 + $0x18] sm:$0xf]
        %v463 = vld [vmem:[%s3] sm:$0x1]
        %v465 = vperm.slane %v463, 0
        %v468 = vsel %vm432, %v462, 0
        %470 = vmatpush.msra.mxu0 0.0
        %471 = vmatpush.msra.mxu0 0.0
        %472 = vmatpush.msra.mxu0 0.0
        %473 = vmatpush.msra.mxu0 0.0
        %474 = vmatpush.msra.mxu0 0.0
        %475 = vmatpush.msra.mxu0 0.0
        %476 = vmatpush.msra.mxu0 0.0
        %477 = vmatpush.msra.mxu0 0.0
        %478 = vmatpush.msra.mxu0 0.0
        %479 = vmatpush.msra.mxu0 0.0
        %480 = vmatpush.msra.mxu0 0.0
        %481 = vmatpush.msra.mxu0 0.0
        %482 = vmatpush.msra.mxu0 %v468
        %483 = vmatpush.msra.mxu0 %v461
        %484 = vmatpush.msra.mxu0 %v460
        %485 = vmatpush.msra.mxu0 %v459
        %486 = vmatmul.f32.gmra.mxu0 %v427
        %v487 = vpop.f32.mrf.mxu0
        %v488 = vadd.f32 %v465, %v487
        %489 = vmatmul.f32.gmra.mxu0 %v430
        %v490 = vpop.f32.mrf.mxu0
        %v491 = vadd.f32 %v465, %v490
        %492 = vdwg.mxu0
        %vm493 = vcmask 523264
        %494 = vst.msk [vmem:[#allocation2 + $0x10] sm:$0xff] %vm493, %v454
        %495 = vst.msk [vmem:[#allocation2 + $0x20] sm:$0xff] %vm493, %v457
        %v496 = vld [vmem:[#allocation2] sm:$0xc0]
        %v497 = vld [vmem:[#allocation2 + $0x10] sm:$0xff]
        %v498 = vld [vmem:[#allocation2 + $0x20] sm:$0x3f]
        %v499 = vld [vmem:[%s4] sm:$0xff]
        %v500 = vld [vmem:[%s4 + $0x8] sm:$0xff]
        %v501 = vld [vmem:[%s4 + $0x10] sm:$0xff]
        %v502 = vld [vmem:[%s4 + $0x18] sm:$0xff]
        %v503 = vld [vmem:[%s4 + $0x20] sm:$0xff]
        %v504 = vld [vmem:[%s4 + $0x28] sm:$0xff]
        %v505 = vld [vmem:[%s4 + $0x30] sm:$0xff]
        %v506 = vld [vmem:[%s4 + $0x38] sm:$0xff]
        %v507 = vld [vmem:[#allocation2] sm:$0x80]
        %v508 = vld [vmem:[#allocation2 + $0x20] sm:$0x7f]
        %s509 = scalar_lea.vmem %s4, 64
        %v510 = vld [vmem:[%s509] sm:$0xff]
        %v511 = vld [vmem:[%s509 + $0x8] sm:$0xff]
        %v512 = vld [vmem:[%s509 + $0x10] sm:$0xff]
        %v513 = vld [vmem:[%s509 + $0x18] sm:$0xff]
        %v514 = vld [vmem:[%s509 + $0x20] sm:$0xff]
        %v515 = vld [vmem:[%s509 + $0x28] sm:$0xff]
        %v516 = vld [vmem:[%s509 + $0x30] sm:$0xff]
        %v517 = vld [vmem:[%s509 + $0x38] sm:$0xff]
        %vm521 = vcmask 1040384
        %v522 = vrot.slane %v507, 7
        %v523 = vrot.slane %v497, 7
        %v524 = vsel %vm521, %v522, %v523
        %v525 = vrot.slane %v508, 7
        %v526 = vsel %vm521, %v523, %v525
        %v527 = vsel %vm493, %v524, 0
        %v529 = vsel %vm493, %v526, 0
        %531 = vmatpush.msra.mxu0 0.0
        %532 = vmatpush.msra.mxu0 0.0
        %533 = vmatpush.msra.mxu0 0.0
        %534 = vmatpush.msra.mxu0 0.0
        %535 = vmatpush.msra.mxu0 0.0
        %536 = vmatpush.msra.mxu0 0.0
        %537 = vmatpush.msra.mxu0 0.0
        %538 = vmatpush.msra.mxu0 0.0
        %539 = vmatpush.msra.mxu0 %v517
        %540 = vmatpush.msra.mxu0 %v516
        %541 = vmatpush.msra.mxu0 %v515
        %542 = vmatpush.msra.mxu0 %v514
        %543 = vmatpush.msra.mxu0 %v513
        %544 = vmatpush.msra.mxu0 %v512
        %545 = vmatpush.msra.mxu0 %v511
        %546 = vmatpush.msra.mxu0 %v510
        %547 = vmatmul.f32.gmra.mxu0 %v527
        %v548 = vpop.f32.mrf.mxu0
        %v549 = vadd.f32 0.0, %v548
        %550 = vmatmul.f32.gmra.mxu0 %v529
        %v551 = vpop.f32.mrf.mxu0
        %v552 = vadd.f32 0.0, %v551
        %553 = vdwg.mxu0
        %vm556 = vcmask 1041408
        %v557 = vrot.slane %v496, 6
        %v558 = vrot.slane %v497, 6
        %v559 = vsel %vm556, %v557, %v558
        %v560 = vrot.slane %v498, 6
        %v561 = vsel %vm556, %v558, %v560
        %v562 = vsel %vm493, %v559, 0
        %v564 = vsel %vm493, %v561, 0
        %566 = vmatpush.msra.mxu0 0.0
        %567 = vmatpush.msra.mxu0 0.0
        %568 = vmatpush.msra.mxu0 0.0
        %569 = vmatpush.msra.mxu0 0.0
        %570 = vmatpush.msra.mxu0 0.0
        %571 = vmatpush.msra.mxu0 0.0
        %572 = vmatpush.msra.mxu0 0.0
        %573 = vmatpush.msra.mxu0 0.0
        %574 = vmatpush.msra.mxu0 %v506
        %575 = vmatpush.msra.mxu0 %v505
        %576 = vmatpush.msra.mxu0 %v504
        %577 = vmatpush.msra.mxu0 %v503
        %578 = vmatpush.msra.mxu0 %v502
        %579 = vmatpush.msra.mxu0 %v501
        %580 = vmatpush.msra.mxu0 %v500
        %581 = vmatpush.msra.mxu0 %v499
        %582 = vmatmul.f32.gmra.mxu0 %v562
        %v583 = vpop.f32.mrf.mxu0
        %v584 = vadd.f32 %v549, %v583
        %585 = vmatmul.f32.gmra.mxu0 %v564
        %v586 = vpop.f32.mrf.mxu0
        %v587 = vadd.f32 %v552, %v586
        %588 = vdwg.mxu0
        %v589 = vld [vmem:[#allocation2 + $0x20] sm:$0xff]
        %s590 = scalar_lea.vmem %s4, 128
        %v591 = vld [vmem:[%s590] sm:$0xff]
        %v592 = vld [vmem:[%s590 + $0x8] sm:$0xff]
        %v593 = vld [vmem:[%s590 + $0x10] sm:$0xff]
        %v594 = vld [vmem:[%s590 + $0x18] sm:$0xff]
        %v595 = vld [vmem:[%s590 + $0x20] sm:$0xff]
        %v596 = vld [vmem:[%s590 + $0x28] sm:$0xff]
        %v597 = vld [vmem:[%s590 + $0x30] sm:$0xff]
        %v598 = vld [vmem:[%s590 + $0x38] sm:$0xff]
        %v599 = vsel %vm493, %v497, 0
        %v602 = vsel %vm493, %v589, 0
        %604 = vmatpush.msra.mxu0 0.0
        %605 = vmatpush.msra.mxu0 0.0
        %606 = vmatpush.msra.mxu0 0.0
        %607 = vmatpush.msra.mxu0 0.0
        %608 = vmatpush.msra.mxu0 0.0
        %609 = vmatpush.msra.mxu0 0.0
        %610 = vmatpush.msra.mxu0 0.0
        %611 = vmatpush.msra.mxu0 0.0
        %612 = vmatpush.msra.mxu0 %v598
        %613 = vmatpush.msra.mxu0 %v597
        %614 = vmatpush.msra.mxu0 %v596
        %615 = vmatpush.msra.mxu0 %v595
        %616 = vmatpush.msra.mxu0 %v594
        %617 = vmatpush.msra.mxu0 %v593
        %618 = vmatpush.msra.mxu0 %v592
        %619 = vmatpush.msra.mxu0 %v591
        %620 = vmatmul.f32.gmra.mxu0 %v599
        %v621 = vpop.f32.mrf.mxu0
        %v622 = vadd.f32 0.0, %v621
        %623 = vmatmul.f32.gmra.mxu0 %v602
        %v624 = vpop.f32.mrf.mxu0
        %v625 = vadd.f32 0.0, %v624
        %626 = vdwg.mxu0
        %v627 = vadd.f32 %v584, %v622
        %v628 = vadd.f32 %v587, %v625
        %v629 = vld [vmem:[#allocation2 + $0x10] sm:$0xfe]
        %v630 = vld [vmem:[#allocation2 + $0x20] sm:$0xff]
        %v631 = vld [vmem:[#allocation2 + $0x30] sm:$0x1]
        %s632 = scalar_lea.vmem %s4, 192
        %v633 = vld [vmem:[%s632] sm:$0xff]
        %v634 = vld [vmem:[%s632 + $0x8] sm:$0xff]
        %v635 = vld [vmem:[%s632 + $0x10] sm:$0xff]
        %v636 = vld [vmem:[%s632 + $0x18] sm:$0xff]
        %v637 = vld [vmem:[%s632 + $0x20] sm:$0xff]
        %v638 = vld [vmem:[%s632 + $0x28] sm:$0xff]
        %v639 = vld [vmem:[%s632 + $0x30] sm:$0xff]
        %v640 = vld [vmem:[%s632 + $0x38] sm:$0xff]
        %vm644 = vcmask 1046528
        %v645 = vrot.slane %v629, 1
        %v646 = vrot.slane %v630, 1
        %v647 = vsel %vm644, %v645, %v646
        %v648 = vrot.slane %v631, 1
        %v649 = vsel %vm644, %v646, %v648
        %v650 = vsel %vm493, %v647, 0
        %v652 = vsel %vm493, %v649, 0
        %654 = vmatpush.msra.mxu0 0.0
        %655 = vmatpush.msra.mxu0 0.0
        %656 = vmatpush.msra.mxu0 0.0
        %657 = vmatpush.msra.mxu0 0.0
        %658 = vmatpush.msra.mxu0 0.0
        %659 = vmatpush.msra.mxu0 0.0
        %660 = vmatpush.msra.mxu0 0.0
        %661 = vmatpush.msra.mxu0 0.0
        %662 = vmatpush.msra.mxu0 %v640
        %663 = vmatpush.msra.mxu0 %v639
        %664 = vmatpush.msra.mxu0 %v638
        %665 = vmatpush.msra.mxu0 %v637
        %666 = vmatpush.msra.mxu0 %v636
        %667 = vmatpush.msra.mxu0 %v635
        %668 = vmatpush.msra.mxu0 %v634
        %669 = vmatpush.msra.mxu0 %v633
        %670 = vmatmul.f32.gmra.mxu0 %v650
        %v671 = vpop.f32.mrf.mxu0
        %v672 = vadd.f32 0.0, %v671
        %673 = vmatmul.f32.gmra.mxu0 %v652
        %v674 = vpop.f32.mrf.mxu0
        %v675 = vadd.f32 0.0, %v674
        %676 = vdwg.mxu0
        %v677 = vadd.f32 %v627, %v672
        %v678 = vadd.f32 %v628, %v675
        %v679 = vld [vmem:[#allocation2 + $0x10] sm:$0xfc]
        %v680 = vld [vmem:[#allocation2 + $0x30] sm:$0x3]
        %s681 = scalar_lea.vmem %s4, 256
        %v682 = vld [vmem:[%s681] sm:$0xff]
        %v683 = vld [vmem:[%s681 + $0x8] sm:$0xff]
        %v684 = vld [vmem:[%s681 + $0x10] sm:$0xff]
        %v685 = vld [vmem:[%s681 + $0x18] sm:$0xff]
        %v686 = vld [vmem:[%s681 + $0x20] sm:$0xff]
        %v687 = vld [vmem:[%s681 + $0x28] sm:$0xff]
        %v688 = vld [vmem:[%s681 + $0x30] sm:$0xff]
        %v689 = vld [vmem:[%s681 + $0x38] sm:$0xff]
        %vm692 = vcmask 1045504
        %v693 = vrot.slane %v679, 2
        %v694 = vrot.slane %v630, 2
        %v695 = vsel %vm692, %v693, %v694
        %v696 = vrot.slane %v680, 2
        %v697 = vsel %vm692, %v694, %v696
        %v698 = vsel %vm493, %v695, 0
        %v700 = vsel %vm493, %v697, 0
        %702 = vmatpush.msra.mxu0 0.0
        %703 = vmatpush.msra.mxu0 0.0
        %704 = vmatpush.msra.mxu0 0.0
        %705 = vmatpush.msra.mxu0 0.0
        %706 = vmatpush.msra.mxu0 0.0
        %707 = vmatpush.msra.mxu0 0.0
        %708 = vmatpush.msra.mxu0 0.0
        %709 = vmatpush.msra.mxu0 0.0
        %710 = vmatpush.msra.mxu0 %v689
        %711 = vmatpush.msra.mxu0 %v688
        %712 = vmatpush.msra.mxu0 %v687
        %713 = vmatpush.msra.mxu0 %v686
        %714 = vmatpush.msra.mxu0 %v685
        %715 = vmatpush.msra.mxu0 %v684
        %716 = vmatpush.msra.mxu0 %v683
        %717 = vmatpush.msra.mxu0 %v682
        %718 = vmatmul.f32.gmra.mxu0 %v698
        %v719 = vpop.f32.mrf.mxu0
        %v720 = vadd.f32 0.0, %v719
        %721 = vmatmul.f32.gmra.mxu0 %v700
        %v722 = vpop.f32.mrf.mxu0
        %v723 = vadd.f32 0.0, %v722
        %724 = vdwg.mxu0
        %v725 = vadd.f32 %v677, %v720
        %v726 = vadd.f32 %v678, %v723
        %727 = vst.msk [vmem:[#allocation2 + $0x10] sm:$0xff] %vm493, %v725
        %728 = vst.msk [vmem:[#allocation2 + $0x20] sm:$0xff] %vm493, %v726
        %v729 = vld [vmem:[#allocation2] sm:$0x80]
        %v730 = vld [vmem:[#allocation2 + $0x10] sm:$0xff]
        %v731 = vld [vmem:[#allocation2 + $0x20] sm:$0x7f]
        %v732 = vld [vmem:[%s5] sm:$0xff]
        %v733 = vld [vmem:[%s5 + $0x8] sm:$0xff]
        %v734 = vld [vmem:[%s5 + $0x10] sm:$0xff]
        %v735 = vld [vmem:[%s5 + $0x18] sm:$0xff]
        %v736 = vld [vmem:[%s5 + $0x20] sm:$0xff]
        %v737 = vld [vmem:[%s5 + $0x28] sm:$0xff]
        %v738 = vld [vmem:[%s5 + $0x30] sm:$0xff]
        %v739 = vld [vmem:[%s5 + $0x38] sm:$0xff]
        %v740 = vld [vmem:[#allocation2 + $0x20] sm:$0xff]
        %s741 = scalar_lea.vmem %s5, 64
        %v742 = vld [vmem:[%s741] sm:$0xff]
        %v743 = vld [vmem:[%s741 + $0x8] sm:$0xff]
        %v744 = vld [vmem:[%s741 + $0x10] sm:$0xff]
        %v745 = vld [vmem:[%s741 + $0x18] sm:$0xff]
        %v746 = vld [vmem:[%s741 + $0x20] sm:$0xff]
        %v747 = vld [vmem:[%s741 + $0x28] sm:$0xff]
        %v748 = vld [vmem:[%s741 + $0x30] sm:$0xff]
        %v749 = vld [vmem:[%s741 + $0x38] sm:$0xff]
        %v751 = vsel %vm493, %v730, 0
        %v754 = vsel %vm493, %v740, 0
        %756 = vmatpush.msra.mxu0 0.0
        %757 = vmatpush.msra.mxu0 0.0
        %758 = vmatpush.msra.mxu0 0.0
        %759 = vmatpush.msra.mxu0 0.0
        %760 = vmatpush.msra.mxu0 0.0
        %761 = vmatpush.msra.mxu0 0.0
        %762 = vmatpush.msra.mxu0 0.0
        %763 = vmatpush.msra.mxu0 0.0
        %764 = vmatpush.msra.mxu0 %v749
        %765 = vmatpush.msra.mxu0 %v748
        %766 = vmatpush.msra.mxu0 %v747
        %767 = vmatpush.msra.mxu0 %v746
        %768 = vmatpush.msra.mxu0 %v745
        %769 = vmatpush.msra.mxu0 %v744
        %770 = vmatpush.msra.mxu0 %v743
        %771 = vmatpush.msra.mxu0 %v742
        %772 = vmatmul.f32.gmra.mxu0 %v751
        %v773 = vpop.f32.mrf.mxu0
        %v774 = vadd.f32 0.0, %v773
        %775 = vmatmul.f32.gmra.mxu0 %v754
        %v776 = vpop.f32.mrf.mxu0
        %v777 = vadd.f32 0.0, %v776
        %778 = vdwg.mxu0
        %v781 = vrot.slane %v729, 7
        %v782 = vrot.slane %v730, 7
        %v783 = vsel %vm521, %v781, %v782
        %v784 = vrot.slane %v731, 7
        %v785 = vsel %vm521, %v782, %v784
        %v786 = vsel %vm493, %v783, 0
        %v788 = vsel %vm493, %v785, 0
        %790 = vmatpush.msra.mxu0 0.0
        %791 = vmatpush.msra.mxu0 0.0
        %792 = vmatpush.msra.mxu0 0.0
        %793 = vmatpush.msra.mxu0 0.0
        %794 = vmatpush.msra.mxu0 0.0
        %795 = vmatpush.msra.mxu0 0.0
        %796 = vmatpush.msra.mxu0 0.0
        %797 = vmatpush.msra.mxu0 0.0
        %798 = vmatpush.msra.mxu0 %v739
        %799 = vmatpush.msra.mxu0 %v738
        %800 = vmatpush.msra.mxu0 %v737
        %801 = vmatpush.msra.mxu0 %v736
        %802 = vmatpush.msra.mxu0 %v735
        %803 = vmatpush.msra.mxu0 %v734
        %804 = vmatpush.msra.mxu0 %v733
        %805 = vmatpush.msra.mxu0 %v732
        %806 = vmatmul.f32.gmra.mxu0 %v786
        %v807 = vpop.f32.mrf.mxu0
        %v808 = vadd.f32 %v774, %v807
        %809 = vmatmul.f32.gmra.mxu0 %v788
        %v810 = vpop.f32.mrf.mxu0
        %v811 = vadd.f32 %v777, %v810
        %812 = vdwg.mxu0
        %v813 = vld [vmem:[#allocation2 + $0x10] sm:$0xfe]
        %v814 = vld [vmem:[#allocation2 + $0x20] sm:$0xff]
        %v815 = vld [vmem:[#allocation2 + $0x30] sm:$0x1]
        %s816 = scalar_lea.vmem %s5, 128
        %v817 = vld [vmem:[%s816] sm:$0xff]
        %v818 = vld [vmem:[%s816 + $0x8] sm:$0xff]
        %v819 = vld [vmem:[%s816 + $0x10] sm:$0xff]
        %v820 = vld [vmem:[%s816 + $0x18] sm:$0xff]
        %v821 = vld [vmem:[%s816 + $0x20] sm:$0xff]
        %v822 = vld [vmem:[%s816 + $0x28] sm:$0xff]
        %v823 = vld [vmem:[%s816 + $0x30] sm:$0xff]
        %v824 = vld [vmem:[%s816 + $0x38] sm:$0xff]
        %v828 = vrot.slane %v813, 1
        %v829 = vrot.slane %v814, 1
        %v830 = vsel %vm644, %v828, %v829
        %v831 = vrot.slane %v815, 1
        %v832 = vsel %vm644, %v829, %v831
        %v833 = vsel %vm493, %v830, 0
        %v835 = vsel %vm493, %v832, 0
        %837 = vmatpush.msra.mxu0 0.0
        %838 = vmatpush.msra.mxu0 0.0
        %839 = vmatpush.msra.mxu0 0.0
        %840 = vmatpush.msra.mxu0 0.0
        %841 = vmatpush.msra.mxu0 0.0
        %842 = vmatpush.msra.mxu0 0.0
        %843 = vmatpush.msra.mxu0 0.0
        %844 = vmatpush.msra.mxu0 0.0
        %845 = vmatpush.msra.mxu0 %v824
        %846 = vmatpush.msra.mxu0 %v823
        %847 = vmatpush.msra.mxu0 %v822
        %848 = vmatpush.msra.mxu0 %v821
        %849 = vmatpush.msra.mxu0 %v820
        %850 = vmatpush.msra.mxu0 %v819
        %851 = vmatpush.msra.mxu0 %v818
        %852 = vmatpush.msra.mxu0 %v817
        %853 = vmatmul.f32.gmra.mxu0 %v833
        %v854 = vpop.f32.mrf.mxu0
        %v855 = vadd.f32 0.0, %v854
        %856 = vmatmul.f32.gmra.mxu0 %v835
        %v857 = vpop.f32.mrf.mxu0
        %v858 = vadd.f32 0.0, %v857
        %859 = vdwg.mxu0
        %v860 = vadd.f32 %v808, %v855
        %v861 = vadd.f32 %v811, %v858
        %v862 = vadd.f32 %v860, %v488
        %v863 = vadd.f32 %v861, %v491
        %v864 = vmax.f32 %v862, 0.0
        %v865 = vmax.f32 %v863, 0.0
        %866 = vst.msk [vmem:[#allocation2 + $0x10] sm:$0xff] %vm493, %v864
        %867 = vst.msk [vmem:[#allocation2 + $0x20] sm:$0xff] %vm493, %v865
        %v868 = vld [vmem:[#allocation2] sm:$0x80]
        %v869 = vld [vmem:[#allocation2 + $0x10] sm:$0xff]
        %v870 = vld [vmem:[#allocation2 + $0x20] sm:$0x7f]
        %v871 = vld [vmem:[%s6] sm:$0xff]
        %v872 = vld [vmem:[%s6 + $0x8] sm:$0xff]
        %v873 = vld [vmem:[%s6 + $0x10] sm:$0xff]
        %v874 = vld [vmem:[%s6 + $0x18] sm:$0xff]
        %v875 = vld [vmem:[%s6 + $0x20] sm:$0xff]
        %v876 = vld [vmem:[%s6 + $0x28] sm:$0xff]
        %v877 = vld [vmem:[%s6 + $0x30] sm:$0xff]
        %v878 = vld [vmem:[%s6 + $0x38] sm:$0xff]
        %v879 = vld [vmem:[#allocation2 + $0x20] sm:$0xff]
        %s880 = scalar_lea.vmem %s6, 64
        %v881 = vld [vmem:[%s880] sm:$0xff]
        %v882 = vld [vmem:[%s880 + $0x8] sm:$0xff]
        %v883 = vld [vmem:[%s880 + $0x10] sm:$0xff]
        %v884 = vld [vmem:[%s880 + $0x18] sm:$0xff]
        %v885 = vld [vmem:[%s880 + $0x20] sm:$0xff]
        %v886 = vld [vmem:[%s880 + $0x28] sm:$0xff]
        %v887 = vld [vmem:[%s880 + $0x30] sm:$0xff]
        %v888 = vld [vmem:[%s880 + $0x38] sm:$0xff]
        %v890 = vsel %vm493, %v869, 0
        %v893 = vsel %vm493, %v879, 0
        %895 = vmatpush.msra.mxu0 0.0
        %896 = vmatpush.msra.mxu0 0.0
        %897 = vmatpush.msra.mxu0 0.0
        %898 = vmatpush.msra.mxu0 0.0
        %899 = vmatpush.msra.mxu0 0.0
        %900 = vmatpush.msra.mxu0 0.0
        %901 = vmatpush.msra.mxu0 0.0
        %902 = vmatpush.msra.mxu0 0.0
        %903 = vmatpush.msra.mxu0 %v888
        %904 = vmatpush.msra.mxu0 %v887
        %905 = vmatpush.msra.mxu0 %v886
        %906 = vmatpush.msra.mxu0 %v885
        %907 = vmatpush.msra.mxu0 %v884
        %908 = vmatpush.msra.mxu0 %v883
        %909 = vmatpush.msra.mxu0 %v882
        %910 = vmatpush.msra.mxu0 %v881
        %911 = vmatmul.f32.gmra.mxu0 %v890
        %v912 = vpop.f32.mrf.mxu0
        %v913 = vadd.f32 0.0, %v912
        %914 = vmatmul.f32.gmra.mxu0 %v893
        %v915 = vpop.f32.mrf.mxu0
        %v916 = vadd.f32 0.0, %v915
        %917 = vdwg.mxu0
        %v920 = vrot.slane %v868, 7
        %v921 = vrot.slane %v869, 7
        %v922 = vsel %vm521, %v920, %v921
        %v923 = vrot.slane %v870, 7
        %v924 = vsel %vm521, %v921, %v923
        %v925 = vsel %vm493, %v922, 0
        %v927 = vsel %vm493, %v924, 0
        %929 = vmatpush.msra.mxu0 0.0
        %930 = vmatpush.msra.mxu0 0.0
        %931 = vmatpush.msra.mxu0 0.0
        %932 = vmatpush.msra.mxu0 0.0
        %933 = vmatpush.msra.mxu0 0.0
        %934 = vmatpush.msra.mxu0 0.0
        %935 = vmatpush.msra.mxu0 0.0
        %936 = vmatpush.msra.mxu0 0.0
        %937 = vmatpush.msra.mxu0 %v878
        %938 = vmatpush.msra.mxu0 %v877
        %939 = vmatpush.msra.mxu0 %v876
        %940 = vmatpush.msra.mxu0 %v875
        %941 = vmatpush.msra.mxu0 %v874
        %942 = vmatpush.msra.mxu0 %v873
        %943 = vmatpush.msra.mxu0 %v872
        %944 = vmatpush.msra.mxu0 %v871
        %945 = vmatmul.f32.gmra.mxu0 %v925
        %v946 = vpop.f32.mrf.mxu0
        %v947 = vadd.f32 %v913, %v946
        %948 = vmatmul.f32.gmra.mxu0 %v927
        %v949 = vpop.f32.mrf.mxu0
        %v950 = vadd.f32 %v916, %v949
        %951 = vdwg.mxu0
        %v952 = vld [vmem:[#allocation2 + $0x10] sm:$0xfe]
        %v953 = vld [vmem:[#allocation2 + $0x20] sm:$0xff]
        %v954 = vld [vmem:[#allocation2 + $0x30] sm:$0x1]
        %s955 = scalar_lea.vmem %s6, 128
        %v956 = vld [vmem:[%s955] sm:$0xff]
        %v957 = vld [vmem:[%s955 + $0x8] sm:$0xff]
        %v958 = vld [vmem:[%s955 + $0x10] sm:$0xff]
        %v959 = vld [vmem:[%s955 + $0x18] sm:$0xff]
        %v960 = vld [vmem:[%s955 + $0x20] sm:$0xff]
        %v961 = vld [vmem:[%s955 + $0x28] sm:$0xff]
        %v962 = vld [vmem:[%s955 + $0x30] sm:$0xff]
        %v963 = vld [vmem:[%s955 + $0x38] sm:$0xff]
        %v967 = vrot.slane %v952, 1
        %v968 = vrot.slane %v953, 1
        %v969 = vsel %vm644, %v967, %v968
        %v970 = vrot.slane %v954, 1
        %v971 = vsel %vm644, %v968, %v970
        %v972 = vsel %vm493, %v969, 0
        %v974 = vsel %vm493, %v971, 0
        %976 = vmatpush.msra.mxu0 0.0
        %977 = vmatpush.msra.mxu0 0.0
        %978 = vmatpush.msra.mxu0 0.0
        %979 = vmatpush.msra.mxu0 0.0
        %980 = vmatpush.msra.mxu0 0.0
        %981 = vmatpush.msra.mxu0 0.0
        %982 = vmatpush.msra.mxu0 0.0
        %983 = vmatpush.msra.mxu0 0.0
        %984 = vmatpush.msra.mxu0 %v963
        %985 = vmatpush.msra.mxu0 %v962
        %986 = vmatpush.msra.mxu0 %v961
        %987 = vmatpush.msra.mxu0 %v960
        %988 = vmatpush.msra.mxu0 %v959
        %989 = vmatpush.msra.mxu0 %v958
        %990 = vmatpush.msra.mxu0 %v957
        %991 = vmatpush.msra.mxu0 %v956
        %992 = vmatmul.f32.gmra.mxu0 %v972
        %v993 = vpop.f32.mrf.mxu0
        %v994 = vadd.f32 0.0, %v993
        %995 = vmatmul.f32.gmra.mxu0 %v974
        %v996 = vpop.f32.mrf.mxu0
        %v997 = vadd.f32 0.0, %v996
        %998 = vdwg.mxu0
        %v999 = vadd.f32 %v947, %v994
        %v1000 = vadd.f32 %v950, %v997
        %v1001 = vld [vmem:[%s7] sm:$0x1]
        %v1003 = vperm.slane %v1001, 0
        %v1005 = vadd.f32 %v999, %v1003
        %v1006 = vadd.f32 %v1000, %v1003
        %vm1007 = vcmp.gt.f32.partialorder %v1005, 0.0
        %vm1008 = vcmp.gt.f32.partialorder %v1006, 0.0
        %v1009 = vmul.f32 %v1005, 0.2
        %v1010 = vmul.f32 %v1006, 0.2
        %v1011 = vsel %vm1007, %v1005, %v1009
        %v1012 = vsel %vm1008, %v1006, %v1010
        %1013 = vst [vmem:[#allocation2 + $0x10] sm:$0xff] %v1011
        %1014 = vst [vmem:[#allocation2 + $0x20] sm:$0xff] %v1012
        %v1015 = vld [vmem:[#allocation2] sm:$0x80]
        %v1016 = vld [vmem:[#allocation2 + $0x10] sm:$0xff]
        %v1017 = vld [vmem:[#allocation2 + $0x20] sm:$0x7f]
        %v1018 = vld [vmem:[%s8] sm:$0xff]
        %v1019 = vld [vmem:[%s8 + $0x8] sm:$0xff]
        %v1020 = vld [vmem:[%s8 + $0x10] sm:$0xff]
        %v1021 = vld [vmem:[%s8 + $0x18] sm:$0xff]
        %v1022 = vld [vmem:[%s8 + $0x20] sm:$0xff]
        %v1023 = vld [vmem:[%s8 + $0x28] sm:$0xff]
        %v1024 = vld [vmem:[%s8 + $0x30] sm:$0xff]
        %v1025 = vld [vmem:[%s8 + $0x38] sm:$0xff]
        %v1026 = vld [vmem:[%s8 + $0x40] sm:$0xff]
        %v1027 = vld [vmem:[%s8 + $0x48] sm:$0xff]
        %v1028 = vld [vmem:[%s8 + $0x50] sm:$0xff]
        %v1029 = vld [vmem:[%s8 + $0x58] sm:$0xff]
        %v1030 = vld [vmem:[%s8 + $0x60] sm:$0xff]
        %v1031 = vld [vmem:[%s8 + $0x68] sm:$0xff]
        %v1032 = vld [vmem:[%s8 + $0x70] sm:$0xff]
        %v1033 = vld [vmem:[%s8 + $0x78] sm:$0xff]
        %v1034 = vld [vmem:[%s8 + $0x80] sm:$0xff]
        %v1035 = vld [vmem:[%s8 + $0x88] sm:$0xff]
        %v1036 = vld [vmem:[%s8 + $0x90] sm:$0xff]
        %v1037 = vld [vmem:[%s8 + $0x98] sm:$0xff]
        %v1038 = vld [vmem:[%s8 + $0xa0] sm:$0xff]
        %v1039 = vld [vmem:[%s8 + $0xa8] sm:$0xff]
        %v1040 = vld [vmem:[%s8 + $0xb0] sm:$0xff]
        %v1041 = vld [vmem:[%s8 + $0xb8] sm:$0xff]
        %v1042 = vld [vmem:[%s8 + $0xc0] sm:$0xff]
        %v1043 = vld [vmem:[%s8 + $0xc8] sm:$0xff]
        %v1044 = vld [vmem:[%s8 + $0xd0] sm:$0xff]
        %v1045 = vld [vmem:[%s8 + $0xd8] sm:$0xff]
        %v1046 = vld [vmem:[%s8 + $0xe0] sm:$0xff]
        %v1047 = vld [vmem:[%s8 + $0xe8] sm:$0xff]
        %v1048 = vld [vmem:[%s8 + $0xf0] sm:$0xff]
        %v1049 = vld [vmem:[%s8 + $0xf8] sm:$0xff]
        %v1050 = vld [vmem:[#allocation2 + $0x20] sm:$0xff]
        %s1051 = scalar_lea.vmem %s8, 256
        %v1052 = vld [vmem:[%s1051] sm:$0xff]
        %v1053 = vld [vmem:[%s1051 + $0x8] sm:$0xff]
        %v1054 = vld [vmem:[%s1051 + $0x10] sm:$0xff]
        %v1055 = vld [vmem:[%s1051 + $0x18] sm:$0xff]
        %v1056 = vld [vmem:[%s1051 + $0x20] sm:$0xff]
        %v1057 = vld [vmem:[%s1051 + $0x28] sm:$0xff]
        %v1058 = vld [vmem:[%s1051 + $0x30] sm:$0xff]
        %v1059 = vld [vmem:[%s1051 + $0x38] sm:$0xff]
        %v1060 = vld [vmem:[%s1051 + $0x40] sm:$0xff]
        %v1061 = vld [vmem:[%s1051 + $0x48] sm:$0xff]
        %v1062 = vld [vmem:[%s1051 + $0x50] sm:$0xff]
        %v1063 = vld [vmem:[%s1051 + $0x58] sm:$0xff]
        %v1064 = vld [vmem:[%s1051 + $0x60] sm:$0xff]
        %v1065 = vld [vmem:[%s1051 + $0x68] sm:$0xff]
        %v1066 = vld [vmem:[%s1051 + $0x70] sm:$0xff]
        %v1067 = vld [vmem:[%s1051 + $0x78] sm:$0xff]
        %v1068 = vld [vmem:[%s1051 + $0x80] sm:$0xff]
        %v1069 = vld [vmem:[%s1051 + $0x88] sm:$0xff]
        %v1070 = vld [vmem:[%s1051 + $0x90] sm:$0xff]
        %v1071 = vld [vmem:[%s1051 + $0x98] sm:$0xff]
        %v1072 = vld [vmem:[%s1051 + $0xa0] sm:$0xff]
        %v1073 = vld [vmem:[%s1051 + $0xa8] sm:$0xff]
        %v1074 = vld [vmem:[%s1051 + $0xb0] sm:$0xff]
        %v1075 = vld [vmem:[%s1051 + $0xb8] sm:$0xff]
        %v1076 = vld [vmem:[%s1051 + $0xc0] sm:$0xff]
        %v1077 = vld [vmem:[%s1051 + $0xc8] sm:$0xff]
        %v1078 = vld [vmem:[%s1051 + $0xd0] sm:$0xff]
        %v1079 = vld [vmem:[%s1051 + $0xd8] sm:$0xff]
        %v1080 = vld [vmem:[%s1051 + $0xe0] sm:$0xff]
        %v1081 = vld [vmem:[%s1051 + $0xe8] sm:$0xff]
        %v1082 = vld [vmem:[%s1051 + $0xf0] sm:$0xff]
        %v1083 = vld [vmem:[%s1051 + $0xf8] sm:$0xff]
        %1084 = vmatpush.msra.mxu0 %v1082
        %1085 = vmatpush.msra.mxu0 %v1080
        %1086 = vmatpush.msra.mxu0 %v1078
        %1087 = vmatpush.msra.mxu0 %v1076
        %1088 = vmatpush.msra.mxu0 %v1074
        %1089 = vmatpush.msra.mxu0 %v1072
        %1090 = vmatpush.msra.mxu0 %v1070
        %1091 = vmatpush.msra.mxu0 %v1068
        %1092 = vmatpush.msra.mxu0 %v1066
        %1093 = vmatpush.msra.mxu0 %v1064
        %1094 = vmatpush.msra.mxu0 %v1062
        %1095 = vmatpush.msra.mxu0 %v1060
        %1096 = vmatpush.msra.mxu0 %v1058
        %1097 = vmatpush.msra.mxu0 %v1056
        %1098 = vmatpush.msra.mxu0 %v1054
        %1099 = vmatpush.msra.mxu0 %v1052
        %1100 = vmatmul.f32.gmra.mxu0 %v1016
        %v1101 = vpop.f32.mrf.mxu0
        %v1102 = vadd.f32 0.0, %v1101
        %1103 = vmatmul.f32.gmra.mxu0 %v1050
        %v1104 = vpop.f32.mrf.mxu0
        %v1105 = vadd.f32 0.0, %v1104
        %1106 = vdwg.mxu0
        %1107 = vmatpush.msra.mxu0 %v1083
        %1108 = vmatpush.msra.mxu0 %v1081
        %1109 = vmatpush.msra.mxu0 %v1079
        %1110 = vmatpush.msra.mxu0 %v1077
        %1111 = vmatpush.msra.mxu0 %v1075
        %1112 = vmatpush.msra.mxu0 %v1073
        %1113 = vmatpush.msra.mxu0 %v1071
        %1114 = vmatpush.msra.mxu0 %v1069
        %1115 = vmatpush.msra.mxu0 %v1067
        %1116 = vmatpush.msra.mxu0 %v1065
        %1117 = vmatpush.msra.mxu0 %v1063
        %1118 = vmatpush.msra.mxu0 %v1061
        %1119 = vmatpush.msra.mxu0 %v1059
        %1120 = vmatpush.msra.mxu0 %v1057
        %1121 = vmatpush.msra.mxu0 %v1055
        %1122 = vmatpush.msra.mxu0 %v1053
        %1123 = vmatmul.f32.gmra.mxu0 %v1016
        %v1124 = vpop.f32.mrf.mxu0
        %v1125 = vadd.f32 0.0, %v1124
        %1126 = vmatmul.f32.gmra.mxu0 %v1050
        %v1127 = vpop.f32.mrf.mxu0
        %v1128 = vadd.f32 0.0, %v1127
        %1129 = vdwg.mxu0
        %v1133 = vrot.slane %v1015, 7
        %v1134 = vrot.slane %v1016, 7
        %v1135 = vsel %vm521, %v1133, %v1134
        %v1136 = vrot.slane %v1017, 7
        %v1137 = vsel %vm521, %v1134, %v1136
        %1140 = vmatpush.msra.mxu0 %v1048
        %1141 = vmatpush.msra.mxu0 %v1046
        %1142 = vmatpush.msra.mxu0 %v1044
        %1143 = vmatpush.msra.mxu0 %v1042
        %1144 = vmatpush.msra.mxu0 %v1040
        %1145 = vmatpush.msra.mxu0 %v1038
        %1146 = vmatpush.msra.mxu0 %v1036
        %1147 = vmatpush.msra.mxu0 %v1034
        %1148 = vmatpush.msra.mxu0 %v1032
        %1149 = vmatpush.msra.mxu0 %v1030
        %1150 = vmatpush.msra.mxu0 %v1028
        %1151 = vmatpush.msra.mxu0 %v1026
        %1152 = vmatpush.msra.mxu0 %v1024
        %1153 = vmatpush.msra.mxu0 %v1022
        %1154 = vmatpush.msra.mxu0 %v1020
        %1155 = vmatpush.msra.mxu0 %v1018
        %1156 = vmatmul.f32.gmra.mxu0 %v1135
        %v1157 = vpop.f32.mrf.mxu0
        %v1158 = vadd.f32 %v1102, %v1157
        %1159 = vmatmul.f32.gmra.mxu0 %v1137
        %v1160 = vpop.f32.mrf.mxu0
        %v1161 = vadd.f32 %v1105, %v1160
        %1162 = vdwg.mxu0
        %1163 = vmatpush.msra.mxu0 %v1049
        %1164 = vmatpush.msra.mxu0 %v1047
        %1165 = vmatpush.msra.mxu0 %v1045
        %1166 = vmatpush.msra.mxu0 %v1043
        %1167 = vmatpush.msra.mxu0 %v1041
        %1168 = vmatpush.msra.mxu0 %v1039
        %1169 = vmatpush.msra.mxu0 %v1037
        %1170 = vmatpush.msra.mxu0 %v1035
        %1171 = vmatpush.msra.mxu0 %v1033
        %1172 = vmatpush.msra.mxu0 %v1031
        %1173 = vmatpush.msra.mxu0 %v1029
        %1174 = vmatpush.msra.mxu0 %v1027
        %1175 = vmatpush.msra.mxu0 %v1025
        %1176 = vmatpush.msra.mxu0 %v1023
        %1177 = vmatpush.msra.mxu0 %v1021
        %1178 = vmatpush.msra.mxu0 %v1019
        %1179 = vmatmul.f32.gmra.mxu0 %v1135
        %v1180 = vpop.f32.mrf.mxu0
        %v1181 = vadd.f32 %v1125, %v1180
        %1182 = vmatmul.f32.gmra.mxu0 %v1137
        %v1183 = vpop.f32.mrf.mxu0
        %v1184 = vadd.f32 %v1128, %v1183
        %1185 = vdwg.mxu0
        %v1186 = vld [vmem:[#allocation2 + $0x10] sm:$0xfe]
        %v1187 = vld [vmem:[#allocation2 + $0x20] sm:$0xff]
        %v1188 = vld [vmem:[#allocation2 + $0x30] sm:$0x1]
        %s1189 = scalar_lea.vmem %s8, 512
        %v1190 = vld [vmem:[%s1189] sm:$0xff]
        %v1191 = vld [vmem:[%s1189 + $0x8] sm:$0xff]
        %v1192 = vld [vmem:[%s1189 + $0x10] sm:$0xff]
        %v1193 = vld [vmem:[%s1189 + $0x18] sm:$0xff]
        %v1194 = vld [vmem:[%s1189 + $0x20] sm:$0xff]
        %v1195 = vld [vmem:[%s1189 + $0x28] sm:$0xff]
        %v1196 = vld [vmem:[%s1189 + $0x30] sm:$0xff]
        %v1197 = vld [vmem:[%s1189 + $0x38] sm:$0xff]
        %v1198 = vld [vmem:[%s1189 + $0x40] sm:$0xff]
        %v1199 = vld [vmem:[%s1189 + $0x48] sm:$0xff]
        %v1200 = vld [vmem:[%s1189 + $0x50] sm:$0xff]
        %v1201 = vld [vmem:[%s1189 + $0x58] sm:$0xff]
        %v1202 = vld [vmem:[%s1189 + $0x60] sm:$0xff]
        %v1203 = vld [vmem:[%s1189 + $0x68] sm:$0xff]
        %v1204 = vld [vmem:[%s1189 + $0x70] sm:$0xff]
        %v1205 = vld [vmem:[%s1189 + $0x78] sm:$0xff]
        %v1206 = vld [vmem:[%s1189 + $0x80] sm:$0xff]
        %v1207 = vld [vmem:[%s1189 + $0x88] sm:$0xff]
        %v1208 = vld [vmem:[%s1189 + $0x90] sm:$0xff]
        %v1209 = vld [vmem:[%s1189 + $0x98] sm:$0xff]
        %v1210 = vld [vmem:[%s1189 + $0xa0] sm:$0xff]
        %v1211 = vld [vmem:[%s1189 + $0xa8] sm:$0xff]
        %v1212 = vld [vmem:[%s1189 + $0xb0] sm:$0xff]
        %v1213 = vld [vmem:[%s1189 + $0xb8] sm:$0xff]
        %v1214 = vld [vmem:[%s1189 + $0xc0] sm:$0xff]
        %v1215 = vld [vmem:[%s1189 + $0xc8] sm:$0xff]
        %v1216 = vld [vmem:[%s1189 + $0xd0] sm:$0xff]
        %v1217 = vld [vmem:[%s1189 + $0xd8] sm:$0xff]
        %v1218 = vld [vmem:[%s1189 + $0xe0] sm:$0xff]
        %v1219 = vld [vmem:[%s1189 + $0xe8] sm:$0xff]
        %v1220 = vld [vmem:[%s1189 + $0xf0] sm:$0xff]
        %v1221 = vld [vmem:[%s1189 + $0xf8] sm:$0xff]
        %v1225 = vrot.slane %v1186, 1
        %v1226 = vrot.slane %v1187, 1
        %v1227 = vsel %vm644, %v1225, %v1226
        %v1228 = vrot.slane %v1188, 1
        %v1229 = vsel %vm644, %v1226, %v1228
        %1232 = vmatpush.msra.mxu0 %v1220
        %1233 = vmatpush.msra.mxu0 %v1218
        %1234 = vmatpush.msra.mxu0 %v1216
        %1235 = vmatpush.msra.mxu0 %v1214
        %1236 = vmatpush.msra.mxu0 %v1212
        %1237 = vmatpush.msra.mxu0 %v1210
        %1238 = vmatpush.msra.mxu0 %v1208
        %1239 = vmatpush.msra.mxu0 %v1206
        %1240 = vmatpush.msra.mxu0 %v1204
        %1241 = vmatpush.msra.mxu0 %v1202
        %1242 = vmatpush.msra.mxu0 %v1200
        %1243 = vmatpush.msra.mxu0 %v1198
        %1244 = vmatpush.msra.mxu0 %v1196
        %1245 = vmatpush.msra.mxu0 %v1194
        %1246 = vmatpush.msra.mxu0 %v1192
        %1247 = vmatpush.msra.mxu0 %v1190
        %1248 = vmatmul.f32.gmra.mxu0 %v1227
        %v1249 = vpop.f32.mrf.mxu0
        %v1250 = vadd.f32 0.0, %v1249
        %1251 = vmatmul.f32.gmra.mxu0 %v1229
        %v1252 = vpop.f32.mrf.mxu0
        %v1253 = vadd.f32 0.0, %v1252
        %1254 = vdwg.mxu0
        %1255 = vmatpush.msra.mxu0 %v1221
        %1256 = vmatpush.msra.mxu0 %v1219
        %1257 = vmatpush.msra.mxu0 %v1217
        %1258 = vmatpush.msra.mxu0 %v1215
        %1259 = vmatpush.msra.mxu0 %v1213
        %1260 = vmatpush.msra.mxu0 %v1211
        %1261 = vmatpush.msra.mxu0 %v1209
        %1262 = vmatpush.msra.mxu0 %v1207
        %1263 = vmatpush.msra.mxu0 %v1205
        %1264 = vmatpush.msra.mxu0 %v1203
        %1265 = vmatpush.msra.mxu0 %v1201
        %1266 = vmatpush.msra.mxu0 %v1199
        %1267 = vmatpush.msra.mxu0 %v1197
        %1268 = vmatpush.msra.mxu0 %v1195
        %1269 = vmatpush.msra.mxu0 %v1193
        %1270 = vmatpush.msra.mxu0 %v1191
        %1271 = vmatmul.f32.gmra.mxu0 %v1227
        %v1272 = vpop.f32.mrf.mxu0
        %v1273 = vadd.f32 0.0, %v1272
        %1274 = vmatmul.f32.gmra.mxu0 %v1229
        %v1275 = vpop.f32.mrf.mxu0
        %v1276 = vadd.f32 0.0, %v1275
        %1277 = vdwg.mxu0
        %v1278 = vadd.f32 %v1158, %v1250
        %v1279 = vadd.f32 %v1181, %v1273
        %v1280 = vadd.f32 %v1161, %v1253
        %v1281 = vadd.f32 %v1184, %v1276
        %v1282 = vld [vmem:[%s9] sm:$0x3]
        %v1284 = vperm.slane %v1282, 0
        %v1285 = vperm.slane %v1282, 1
        %v1288 = vadd.f32 %v1278, %v1284
        %v1289 = vadd.f32 %v1279, %v1285
        %v1290 = vadd.f32 %v1280, %v1284
        %v1291 = vadd.f32 %v1281, %v1285
        %vm1292 = vcmp.gt.f32.partialorder %v1288, 0.0
        %vm1293 = vcmp.gt.f32.partialorder %v1289, 0.0
        %vm1294 = vcmp.gt.f32.partialorder %v1290, 0.0
        %vm1295 = vcmp.gt.f32.partialorder %v1291, 0.0
        %v1296 = vmul.f32 %v1288, 0.25
        %v1297 = vmul.f32 %v1289, 0.25
        %v1298 = vmul.f32 %v1290, 0.25
        %v1299 = vmul.f32 %v1291, 0.25
        %v1300 = vsel %vm1292, %v1288, %v1296
        %v1301 = vsel %vm1293, %v1289, %v1297
        %v1302 = vsel %vm1294, %v1290, %v1298
        %v1303 = vsel %vm1295, %v1291, %v1299
        %1304 = vst [vmem:[#allocation2 + $0x10] sm:$0xff] %v1300
        %1305 = vst [vmem:[#allocation2 + $0x18] sm:$0xff] %v1301
        %1306 = vst [vmem:[#allocation2 + $0x20] sm:$0xff] %v1302
        %1307 = vst [vmem:[#allocation2 + $0x28] sm:$0xff] %v1303
        %v1308 = vld [vmem:[#allocation2] sm:$0x80]
        %v1309 = vld [vmem:[#allocation2 + $0x8] sm:$0x80]
        %v1310 = vld [vmem:[#allocation2 + $0x10] sm:$0xff]
        %v1311 = vld [vmem:[#allocation2 + $0x18] sm:$0xff]
        %v1312 = vld [vmem:[#allocation2 + $0x20] sm:$0x7f]
        %v1313 = vld [vmem:[#allocation2 + $0x28] sm:$0x7f]
        %v1314 = vld [vmem:[%s10] sm:$0xff]
        %v1315 = vld [vmem:[%s10 + $0x8] sm:$0xff]
        %v1316 = vld [vmem:[%s10 + $0x10] sm:$0xff]
        %v1317 = vld [vmem:[%s10 + $0x18] sm:$0xff]
        %v1318 = vld [vmem:[%s10 + $0x20] sm:$0xff]
        %v1319 = vld [vmem:[%s10 + $0x28] sm:$0xff]
        %v1320 = vld [vmem:[%s10 + $0x30] sm:$0xff]
        %v1321 = vld [vmem:[%s10 + $0x38] sm:$0xff]
        %v1322 = vld [vmem:[%s10 + $0x40] sm:$0xff]
        %v1323 = vld [vmem:[%s10 + $0x48] sm:$0xff]
        %v1324 = vld [vmem:[%s10 + $0x50] sm:$0xff]
        %v1325 = vld [vmem:[%s10 + $0x58] sm:$0xff]
        %v1326 = vld [vmem:[%s10 + $0x60] sm:$0xff]
        %v1327 = vld [vmem:[%s10 + $0x68] sm:$0xff]
        %v1328 = vld [vmem:[%s10 + $0x70] sm:$0xff]
        %v1329 = vld [vmem:[%s10 + $0x78] sm:$0xff]
        %v1330 = vld [vmem:[%s10 + $0x80] sm:$0xff]
        %v1331 = vld [vmem:[%s10 + $0x88] sm:$0xff]
        %v1332 = vld [vmem:[%s10 + $0x90] sm:$0xff]
        %v1333 = vld [vmem:[%s10 + $0x98] sm:$0xff]
        %v1334 = vld [vmem:[%s10 + $0xa0] sm:$0xff]
        %v1335 = vld [vmem:[%s10 + $0xa8] sm:$0xff]
        %v1336 = vld [vmem:[%s10 + $0xb0] sm:$0xff]
        %v1337 = vld [vmem:[%s10 + $0xb8] sm:$0xff]
        %v1338 = vld [vmem:[%s10 + $0xc0] sm:$0xff]
        %v1339 = vld [vmem:[%s10 + $0xc8] sm:$0xff]
        %v1340 = vld [vmem:[%s10 + $0xd0] sm:$0xff]
        %v1341 = vld [vmem:[%s10 + $0xd8] sm:$0xff]
        %v1342 = vld [vmem:[%s10 + $0xe0] sm:$0xff]
        %v1343 = vld [vmem:[%s10 + $0xe8] sm:$0xff]
        %v1344 = vld [vmem:[%s10 + $0xf0] sm:$0xff]
        %v1345 = vld [vmem:[%s10 + $0xf8] sm:$0xff]
        %v1346 = vld [vmem:[#allocation2 + $0x20] sm:$0xff]
        %v1347 = vld [vmem:[#allocation2 + $0x28] sm:$0xff]
        %s1348 = scalar_lea.vmem %s10, 256
        %v1349 = vld [vmem:[%s1348] sm:$0xff]
        %v1350 = vld [vmem:[%s1348 + $0x8] sm:$0xff]
        %v1351 = vld [vmem:[%s1348 + $0x10] sm:$0xff]
        %v1352 = vld [vmem:[%s1348 + $0x18] sm:$0xff]
        %v1353 = vld [vmem:[%s1348 + $0x20] sm:$0xff]
        %v1354 = vld [vmem:[%s1348 + $0x28] sm:$0xff]
        %v1355 = vld [vmem:[%s1348 + $0x30] sm:$0xff]
        %v1356 = vld [vmem:[%s1348 + $0x38] sm:$0xff]
        %v1357 = vld [vmem:[%s1348 + $0x40] sm:$0xff]
        %v1358 = vld [vmem:[%s1348 + $0x48] sm:$0xff]
        %v1359 = vld [vmem:[%s1348 + $0x50] sm:$0xff]
        %v1360 = vld [vmem:[%s1348 + $0x58] sm:$0xff]
        %v1361 = vld [vmem:[%s1348 + $0x60] sm:$0xff]
        %v1362 = vld [vmem:[%s1348 + $0x68] sm:$0xff]
        %v1363 = vld [vmem:[%s1348 + $0x70] sm:$0xff]
        %v1364 = vld [vmem:[%s1348 + $0x78] sm:$0xff]
        %v1365 = vld [vmem:[%s1348 + $0x80] sm:$0xff]
        %v1366 = vld [vmem:[%s1348 + $0x88] sm:$0xff]
        %v1367 = vld [vmem:[%s1348 + $0x90] sm:$0xff]
        %v1368 = vld [vmem:[%s1348 + $0x98] sm:$0xff]
        %v1369 = vld [vmem:[%s1348 + $0xa0] sm:$0xff]
        %v1370 = vld [vmem:[%s1348 + $0xa8] sm:$0xff]
        %v1371 = vld [vmem:[%s1348 + $0xb0] sm:$0xff]
        %v1372 = vld [vmem:[%s1348 + $0xb8] sm:$0xff]
        %v1373 = vld [vmem:[%s1348 + $0xc0] sm:$0xff]
        %v1374 = vld [vmem:[%s1348 + $0xc8] sm:$0xff]
        %v1375 = vld [vmem:[%s1348 + $0xd0] sm:$0xff]
        %v1376 = vld [vmem:[%s1348 + $0xd8] sm:$0xff]
        %v1377 = vld [vmem:[%s1348 + $0xe0] sm:$0xff]
        %v1378 = vld [vmem:[%s1348 + $0xe8] sm:$0xff]
        %v1379 = vld [vmem:[%s1348 + $0xf0] sm:$0xff]
        %v1380 = vld [vmem:[%s1348 + $0xf8] sm:$0xff]
        %1381 = vmatpush.msra.mxu0 %v1364
        %1382 = vmatpush.msra.mxu0 %v1363
        %1383 = vmatpush.msra.mxu0 %v1362
        %1384 = vmatpush.msra.mxu0 %v1361
        %1385 = vmatpush.msra.mxu0 %v1360
        %1386 = vmatpush.msra.mxu0 %v1359
        %1387 = vmatpush.msra.mxu0 %v1358
        %1388 = vmatpush.msra.mxu0 %v1357
        %1389 = vmatpush.msra.mxu0 %v1356
        %1390 = vmatpush.msra.mxu0 %v1355
        %1391 = vmatpush.msra.mxu0 %v1354
        %1392 = vmatpush.msra.mxu0 %v1353
        %1393 = vmatpush.msra.mxu0 %v1352
        %1394 = vmatpush.msra.mxu0 %v1351
        %1395 = vmatpush.msra.mxu0 %v1350
        %1396 = vmatpush.msra.mxu0 %v1349
        %1397 = vmatmul.f32.gmra.mxu0 %v1310
        %v1398 = vpop.f32.mrf.mxu0
        %v1399 = vadd.f32 0.0, %v1398
        %1400 = vmatmul.f32.gmra.mxu0 %v1346
        %v1401 = vpop.f32.mrf.mxu0
        %v1402 = vadd.f32 0.0, %v1401
        %1403 = vdwg.mxu0
        %1404 = vmatpush.msra.mxu0 %v1380
        %1405 = vmatpush.msra.mxu0 %v1379
        %1406 = vmatpush.msra.mxu0 %v1378
        %1407 = vmatpush.msra.mxu0 %v1377
        %1408 = vmatpush.msra.mxu0 %v1376
        %1409 = vmatpush.msra.mxu0 %v1375
        %1410 = vmatpush.msra.mxu0 %v1374
        %1411 = vmatpush.msra.mxu0 %v1373
        %1412 = vmatpush.msra.mxu0 %v1372
        %1413 = vmatpush.msra.mxu0 %v1371
        %1414 = vmatpush.msra.mxu0 %v1370
        %1415 = vmatpush.msra.mxu0 %v1369
        %1416 = vmatpush.msra.mxu0 %v1368
        %1417 = vmatpush.msra.mxu0 %v1367
        %1418 = vmatpush.msra.mxu0 %v1366
        %1419 = vmatpush.msra.mxu0 %v1365
        %1420 = vmatmul.f32.gmra.mxu0 %v1311
        %v1421 = vpop.f32.mrf.mxu0
        %v1422 = vadd.f32 %v1399, %v1421
        %1423 = vmatmul.f32.gmra.mxu0 %v1347
        %v1424 = vpop.f32.mrf.mxu0
        %v1425 = vadd.f32 %v1402, %v1424
        %1426 = vdwg.mxu0
        %v1433 = vrot.slane %v1308, 7
        %v1434 = vrot.slane %v1310, 7
        %v1435 = vsel %vm521, %v1433, %v1434
        %v1436 = vrot.slane %v1309, 7
        %v1437 = vrot.slane %v1311, 7
        %v1438 = vsel %vm521, %v1436, %v1437
        %v1439 = vrot.slane %v1312, 7
        %v1440 = vsel %vm521, %v1434, %v1439
        %v1441 = vrot.slane %v1313, 7
        %v1442 = vsel %vm521, %v1437, %v1441
        %1447 = vmatpush.msra.mxu0 %v1329
        %1448 = vmatpush.msra.mxu0 %v1328
        %1449 = vmatpush.msra.mxu0 %v1327
        %1450 = vmatpush.msra.mxu0 %v1326
        %1451 = vmatpush.msra.mxu0 %v1325
        %1452 = vmatpush.msra.mxu0 %v1324
        %1453 = vmatpush.msra.mxu0 %v1323
        %1454 = vmatpush.msra.mxu0 %v1322
        %1455 = vmatpush.msra.mxu0 %v1321
        %1456 = vmatpush.msra.mxu0 %v1320
        %1457 = vmatpush.msra.mxu0 %v1319
        %1458 = vmatpush.msra.mxu0 %v1318
        %1459 = vmatpush.msra.mxu0 %v1317
        %1460 = vmatpush.msra.mxu0 %v1316
        %1461 = vmatpush.msra.mxu0 %v1315
        %1462 = vmatpush.msra.mxu0 %v1314
        %1463 = vmatmul.f32.gmra.mxu0 %v1435
        %v1464 = vpop.f32.mrf.mxu0
        %v1465 = vadd.f32 %v1422, %v1464
        %1466 = vmatmul.f32.gmra.mxu0 %v1440
        %v1467 = vpop.f32.mrf.mxu0
        %v1468 = vadd.f32 %v1425, %v1467
        %1469 = vdwg.mxu0
        %1470 = vmatpush.msra.mxu0 %v1345
        %1471 = vmatpush.msra.mxu0 %v1344
        %1472 = vmatpush.msra.mxu0 %v1343
        %1473 = vmatpush.msra.mxu0 %v1342
        %1474 = vmatpush.msra.mxu0 %v1341
        %1475 = vmatpush.msra.mxu0 %v1340
        %1476 = vmatpush.msra.mxu0 %v1339
        %1477 = vmatpush.msra.mxu0 %v1338
        %1478 = vmatpush.msra.mxu0 %v1337
        %1479 = vmatpush.msra.mxu0 %v1336
        %1480 = vmatpush.msra.mxu0 %v1335
        %1481 = vmatpush.msra.mxu0 %v1334
        %1482 = vmatpush.msra.mxu0 %v1333
        %1483 = vmatpush.msra.mxu0 %v1332
        %1484 = vmatpush.msra.mxu0 %v1331
        %1485 = vmatpush.msra.mxu0 %v1330
        %1486 = vmatmul.f32.gmra.mxu0 %v1438
        %v1487 = vpop.f32.mrf.mxu0
        %v1488 = vadd.f32 %v1465, %v1487
        %1489 = vmatmul.f32.gmra.mxu0 %v1442
        %v1490 = vpop.f32.mrf.mxu0
        %v1491 = vadd.f32 %v1468, %v1490
        %1492 = vdwg.mxu0
        %v1493 = vld [vmem:[#allocation2 + $0x10] sm:$0xfe]
        %v1494 = vld [vmem:[#allocation2 + $0x18] sm:$0xfe]
        %v1495 = vld [vmem:[#allocation2 + $0x20] sm:$0xff]
        %v1496 = vld [vmem:[#allocation2 + $0x28] sm:$0xff]
        %v1497 = vld [vmem:[#allocation2 + $0x30] sm:$0x1]
        %v1498 = vld [vmem:[#allocation2 + $0x38] sm:$0x1]
        %s1499 = scalar_lea.vmem %s10, 512
        %v1500 = vld [vmem:[%s1499] sm:$0xff]
        %v1501 = vld [vmem:[%s1499 + $0x8] sm:$0xff]
        %v1502 = vld [vmem:[%s1499 + $0x10] sm:$0xff]
        %v1503 = vld [vmem:[%s1499 + $0x18] sm:$0xff]
        %v1504 = vld [vmem:[%s1499 + $0x20] sm:$0xff]
        %v1505 = vld [vmem:[%s1499 + $0x28] sm:$0xff]
        %v1506 = vld [vmem:[%s1499 + $0x30] sm:$0xff]
        %v1507 = vld [vmem:[%s1499 + $0x38] sm:$0xff]
        %v1508 = vld [vmem:[%s1499 + $0x40] sm:$0xff]
        %v1509 = vld [vmem:[%s1499 + $0x48] sm:$0xff]
        %v1510 = vld [vmem:[%s1499 + $0x50] sm:$0xff]
        %v1511 = vld [vmem:[%s1499 + $0x58] sm:$0xff]
        %v1512 = vld [vmem:[%s1499 + $0x60] sm:$0xff]
        %v1513 = vld [vmem:[%s1499 + $0x68] sm:$0xff]
        %v1514 = vld [vmem:[%s1499 + $0x70] sm:$0xff]
        %v1515 = vld [vmem:[%s1499 + $0x78] sm:$0xff]
        %v1516 = vld [vmem:[%s1499 + $0x80] sm:$0xff]
        %v1517 = vld [vmem:[%s1499 + $0x88] sm:$0xff]
        %v1518 = vld [vmem:[%s1499 + $0x90] sm:$0xff]
        %v1519 = vld [vmem:[%s1499 + $0x98] sm:$0xff]
        %v1520 = vld [vmem:[%s1499 + $0xa0] sm:$0xff]
        %v1521 = vld [vmem:[%s1499 + $0xa8] sm:$0xff]
        %v1522 = vld [vmem:[%s1499 + $0xb0] sm:$0xff]
        %v1523 = vld [vmem:[%s1499 + $0xb8] sm:$0xff]
        %v1524 = vld [vmem:[%s1499 + $0xc0] sm:$0xff]
        %v1525 = vld [vmem:[%s1499 + $0xc8] sm:$0xff]
        %v1526 = vld [vmem:[%s1499 + $0xd0] sm:$0xff]
        %v1527 = vld [vmem:[%s1499 + $0xd8] sm:$0xff]
        %v1528 = vld [vmem:[%s1499 + $0xe0] sm:$0xff]
        %v1529 = vld [vmem:[%s1499 + $0xe8] sm:$0xff]
        %v1530 = vld [vmem:[%s1499 + $0xf0] sm:$0xff]
        %v1531 = vld [vmem:[%s1499 + $0xf8] sm:$0xff]
        %v1538 = vrot.slane %v1493, 1
        %v1539 = vrot.slane %v1495, 1
        %v1540 = vsel %vm644, %v1538, %v1539
        %v1541 = vrot.slane %v1494, 1
        %v1542 = vrot.slane %v1496, 1
        %v1543 = vsel %vm644, %v1541, %v1542
        %v1544 = vrot.slane %v1497, 1
        %v1545 = vsel %vm644, %v1539, %v1544
        %v1546 = vrot.slane %v1498, 1
        %v1547 = vsel %vm644, %v1542, %v1546
        %1552 = vmatpush.msra.mxu0 %v1515
        %1553 = vmatpush.msra.mxu0 %v1514
        %1554 = vmatpush.msra.mxu0 %v1513
        %1555 = vmatpush.msra.mxu0 %v1512
        %1556 = vmatpush.msra.mxu0 %v1511
        %1557 = vmatpush.msra.mxu0 %v1510
        %1558 = vmatpush.msra.mxu0 %v1509
        %1559 = vmatpush.msra.mxu0 %v1508
        %1560 = vmatpush.msra.mxu0 %v1507
        %1561 = vmatpush.msra.mxu0 %v1506
        %1562 = vmatpush.msra.mxu0 %v1505
        %1563 = vmatpush.msra.mxu0 %v1504
        %1564 = vmatpush.msra.mxu0 %v1503
        %1565 = vmatpush.msra.mxu0 %v1502
        %1566 = vmatpush.msra.mxu0 %v1501
        %1567 = vmatpush.msra.mxu0 %v1500
        %1568 = vmatmul.f32.gmra.mxu0 %v1540
        %v1569 = vpop.f32.mrf.mxu0
        %v1570 = vadd.f32 0.0, %v1569
        %1571 = vmatmul.f32.gmra.mxu0 %v1545
        %v1572 = vpop.f32.mrf.mxu0
        %v1573 = vadd.f32 0.0, %v1572
        %1574 = vdwg.mxu0
        %1575 = vmatpush.msra.mxu0 %v1531
        %1576 = vmatpush.msra.mxu0 %v1530
        %1577 = vmatpush.msra.mxu0 %v1529
        %1578 = vmatpush.msra.mxu0 %v1528
        %1579 = vmatpush.msra.mxu0 %v1527
        %1580 = vmatpush.msra.mxu0 %v1526
        %1581 = vmatpush.msra.mxu0 %v1525
        %1582 = vmatpush.msra.mxu0 %v1524
        %1583 = vmatpush.msra.mxu0 %v1523
        %1584 = vmatpush.msra.mxu0 %v1522
        %1585 = vmatpush.msra.mxu0 %v1521
        %1586 = vmatpush.msra.mxu0 %v1520
        %1587 = vmatpush.msra.mxu0 %v1519
        %1588 = vmatpush.msra.mxu0 %v1518
        %1589 = vmatpush.msra.mxu0 %v1517
        %1590 = vmatpush.msra.mxu0 %v1516
        %1591 = vmatmul.f32.gmra.mxu0 %v1543
        %v1592 = vpop.f32.mrf.mxu0
        %v1593 = vadd.f32 %v1570, %v1592
        %1594 = vmatmul.f32.gmra.mxu0 %v1547
        %v1595 = vpop.f32.mrf.mxu0
        %v1596 = vadd.f32 %v1573, %v1595
        %1597 = vdwg.mxu0
        %v1598 = vadd.f32 %v1488, %v1593
        %v1599 = vadd.f32 %v1491, %v1596
        %v1600 = vld [vmem:[%s11] sm:$0x1]
        %v1602 = vperm.slane %v1600, 0
        %v1604 = vadd.f32 %v1598, %v1602
        %v1605 = vadd.f32 %v1599, %v1602
        %vm1606 = vcmp.gt.f32.partialorder %v1604, 0.0
        %vm1607 = vcmp.gt.f32.partialorder %v1605, 0.0
        %v1608 = vmul.f32 %v1604, 1.442695
        %v1609 = vpow.pop %v1608
        %v1610 = vmul.f32 %v1605, 1.442695
        %v1611 = vpow.pop %v1610
        %v1612 = vsub.f32 %v1609, 1.0
        %v1613 = vsub.f32 %v1611, 1.0
        %v1614 = vmul.f32 %v1612, 0.3
        %v1615 = vmul.f32 %v1613, 0.3
        %v1616 = vsel %vm1606, %v1604, %v1614
        %v1617 = vsel %vm1607, %v1605, %v1615
        %v1618 = vadd.f32 %v1616, %v1617
        %v1619 = vrot.slane %v1618, 4
        %v1620 = vadd.f32 %v1618, %v1619
        %v1621 = vrot.slane %v1620, 2
        %v1622 = vadd.f32 %v1620, %v1621
        %v1623 = vrot.slane %v1622, 1
        %v1624 = vadd.f32 %v1622, %v1623
        %v1625 = vrcp.pop 16.0
        %v1626 = vmul.f32 16.0, %v1625
        %v1627 = vsub.f32 1.0, %v1626
        %v1628 = vmul.f32 %v1625, %v1627
        %v1629 = vadd.f32 %v1625, %v1628
        %vm1630 = vweird.f32 %v1625
        %v1631 = vsel %vm1630, %v1625, %v1629
        %v1632 = vmul.f32 %v1624, %v1631
        %1633 = vst [vmem:[%s405] sm:$0x1] %v1632
        %s1634 = sand.u32 %s291, 1
        %s1635 = scalar_lea.sflag [#allocation4], %s1634
        %s1636 = sand.u32 %s291, 1
        %s1637 = scalar_lea.vmem [#allocation3], %s1636
        // Predicated region
        $region69: #{rescnn_forward_pallas.1} parent=67 // pred_check
          %p1638 = pneg %p301
        $region70: #{rescnn_forward_pallas.1} parent=67 // pred_check_branch
          %1640 = sbr.rel (%p1638) target = $region72
        $region71: #{rescnn_forward_pallas.1} parent=67 // pred_region
          %1642 = vsyncadd %s1635, 0
          %s1643 = scalar_lea.hbm %s12, %s26
          %s1645 = sshll.u32 %s1637, 4
          %s1646 = int_to_ptr.vmem [resolvable:$true] %s1645
          %s1647 = sshll.u32 %s1643, 4
          %s1648 = int_to_ptr.hbm [resolvable:$true] %s1647
          %1650 = dma.vmem_to_hbm [thread:$0]  %s1646, 16, %s1648, %s1635
        $region72: #{rescnn_forward_pallas.1} parent=67 // pred_fallthru
          _
      $region68: #{rescnn_forward_pallas.1} parent=5 // pred_fallthru
        _
      %p1651 = scmp.le.s32.totalorder 2, %s21
      // Predicated region
      $region73: #{rescnn_forward_pallas.1} parent=5 // pred_check
        %p1652 = pneg %p1651
      $region74: #{rescnn_forward_pallas.1} parent=5 // pred_check_branch
        %1654 = sbr.rel (%p1652) target = $region76
      $region75: #{rescnn_forward_pallas.1} parent=5 // pred_region
        %s1655 = ssub.s32 %s21, 2
        // Predicated region
        $region77: #{rescnn_forward_pallas.1} parent=75 // pred_check
          %p1656 = pneg %p307
        $region78: #{rescnn_forward_pallas.1} parent=75 // pred_check_branch
          %1658 = sbr.rel (%p1656) target = $region80
        $region79: #{rescnn_forward_pallas.1} parent=75 // pred_region
          %s1659 = sand.u32 %s292, 1
          %s1660 = scalar_lea.sflag [#allocation4], %s1659
          %s1661 = sand.u32 %s292, 1
          %s1662 = scalar_lea.vmem [#allocation3], %s1661
          %1664 = dma.done %s1660, 16
        $region80: #{rescnn_forward_pallas.1} parent=75 // pred_fallthru
          _
      $region76: #{rescnn_forward_pallas.1} parent=5 // pred_fallthru
        _
    $region6: #{rescnn_forward_pallas.1} parent=1 // loop_footer
      %s25 = sadd.s32 1, %s21
    $region7: #{rescnn_forward_pallas.1} parent=1 // loop_footer_branch
      %20 = sbr.rel target = $region3
    $region8: #{rescnn_forward_pallas.1} parent=1 // loop_exit
      _
    %1665 = vsyncpa [#allocation4], 1
    %s1666 = scalar_lea.sflag [#allocation4], 1
    %1667 = vsyncpa %s1666, 1

</llo_original>
